<compile_context>
chip_gen: v7x
topology: tpu7x:2x2x1
jax: 0.10.0
libtpu: 0.0.40
codegen_flags: <defaults>
</compile_context>

<pallas_src>
import jax
import jax.numpy as jnp
from jax import lax
from jax.experimental import pallas as pl
from jax.experimental.pallas import tpu as pltpu


def _fused_relu_conv1x1_bn_kernel(x_ref, w_ref, gamma_ref, beta_ref, o_ref):
    # x_ref:     (Cin, M)   float32  -- resident across the Cout grid
    # w_ref:     (TN, Cin)  float32  -- one Cout tile of the conv weight
    # gamma_ref: (TN, 1)    float32
    # beta_ref:  (TN, 1)    float32
    # o_ref:     (TN, M)    float32
    eps = 1e-5

    # ReLU (VPU).
    x = jnp.maximum(x_ref[...], 0.0)                                   # (Cin, M)

    # 1x1 conv == matmul on the MXU, directly in (channel, pixel) layout:
    #   y[co, m] = sum_ci w[co, ci] * relu(x)[ci, m]
    y = jnp.dot(w_ref[...], x, preferred_element_type=jnp.float32)     # (TN, M)

    # BatchNorm2d with batch statistics (biased variance), one pass.
    # Per-channel sums over the M pixels = lane reductions (XLU).
    inv_m = 1.0 / jnp.float32(y.shape[1])
    sum_y = jnp.sum(y, axis=1, keepdims=True)                          # (TN, 1)
    sum_y2 = jnp.sum(y * y, axis=1, keepdims=True)                     # (TN, 1)
    mean = sum_y * inv_m
    var = jnp.maximum(sum_y2 * inv_m - mean * mean, 0.0)
    scale = gamma_ref[...] * lax.rsqrt(var + eps)                      # (TN, 1)
    shift = beta_ref[...] - mean * scale

    # Fused per-channel scale/shift epilogue.
    o_ref[...] = y * scale + shift


def fused_relu_conv1x1_bn(x_nchw, conv_weight, gamma, beta, *, tile_n=256):
    """x_nchw: (N, Cin, H, W); conv_weight: (Cout, Cin, 1, 1); gamma/beta: (Cout,)."""
    N, Cin, H, W = x_nchw.shape
    Cout = conv_weight.shape[0]
    M = N * H * W

    # ---- glue: free reshapes, no standalone XLA transposes for N == 1 ----
    if N == 1:
        x_cm = x_nchw.reshape(Cin, M).astype(jnp.float32)              # (Cin, M)
    else:
        # TODO(synk): N > 1 in NCHW needs a real layout change before the kernel.
        x_cm = jnp.transpose(x_nchw, (1, 0, 2, 3)).reshape(Cin, M).astype(jnp.float32)
    w2d = conv_weight.reshape(Cout, Cin).astype(jnp.float32)           # (Cout, Cin)
    g2d = gamma.reshape(Cout, 1).astype(jnp.float32)
    b2d = beta.reshape(Cout, 1).astype(jnp.float32)

    tn = min(tile_n, Cout)
    assert Cout % tn == 0, (Cout, tn)

    out_cm = pl.pallas_call(
        _fused_relu_conv1x1_bn_kernel,
        out_shape=jax.ShapeDtypeStruct((Cout, M), jnp.float32),
        grid_spec=pltpu.PrefetchScalarGridSpec(
            num_scalar_prefetch=0,
            grid=(Cout // tn,),
            in_specs=[
                pl.BlockSpec((Cin, M), lambda j: (0, 0)),    # resident input tile
                pl.BlockSpec((tn, Cin), lambda j: (j, 0)),   # streamed weight tile
                pl.BlockSpec((tn, 1), lambda j: (j, 0)),     # gamma tile
                pl.BlockSpec((tn, 1), lambda j: (j, 0)),     # beta tile
            ],
            out_specs=pl.BlockSpec((tn, M), lambda j: (j, 0)),
        ),
        compiler_params=pltpu.CompilerParams(
            dimension_semantics=("parallel",),
        ),
    )(x_cm, w2d, g2d, b2d)

    # ---- glue back to NCHW (free reshape for N == 1) ----
    if N == 1:
        return out_cm.reshape(1, Cout, H, W)
    return jnp.transpose(out_cm.reshape(Cout, N, H, W), (1, 0, 2, 3))


def _reference(x_nchw, conv_weight, gamma, beta):
    # Pure-JAX reference (training-mode BatchNorm with batch statistics).
    x = jnp.maximum(x_nchw, 0.0)
    w = conv_weight[:, :, 0, 0]                                        # (Cout, Cin)
    y = jnp.einsum("nchw,oc->nohw", x, w)
    mean = jnp.mean(y, axis=(0, 2, 3), keepdims=True)
    var = jnp.mean((y - mean) ** 2, axis=(0, 2, 3), keepdims=True)
    g = gamma.reshape(1, -1, 1, 1)
    b = beta.reshape(1, -1, 1, 1)
    return (y - mean) / jnp.sqrt(var + 1e-5) * g + b


if __name__ == "__main__":
    key = jax.random.PRNGKey(0)
    k_x, k_w, k_g, k_b = jax.random.split(key, 4)

    # Shapes implied by the module: Conv2d(256 -> 1024, 1x1), input (1, 256, 14, 14)
    N, Cin, H, W, Cout = 1, 256, 14, 14, 1024

    x = jax.random.normal(k_x, (N, Cin, H, W), dtype=jnp.float32)
    conv_weight = jax.random.normal(k_w, (Cout, Cin, 1, 1), dtype=jnp.float32) * 0.05
    gamma = 1.0 + 0.1 * jax.random.normal(k_g, (Cout,), dtype=jnp.float32)
    beta = 0.1 * jax.random.normal(k_b, (Cout,), dtype=jnp.float32)

    out = fused_relu_conv1x1_bn(x, conv_weight, gamma, beta)
    out = jax.block_until_ready(out)

    ref = _reference(x, conv_weight, gamma, beta)
    assert out.shape == (N, Cout, H, W), out.shape
    assert jnp.allclose(out, ref, atol=1e-3, rtol=1e-3), float(jnp.max(jnp.abs(out - ref)))

    print("KERNEL_OK")
</pallas_src>

<mosaic_0001>
module attributes {stable_mosaic.version = 11 : i64} {
  func.func @_fused_relu_conv1x1_bn_kernel(%arg0: i32, %arg1: memref<256x196xf32, #tpu.memory_space<vmem>>, %arg2: memref<256x256xf32, #tpu.memory_space<vmem>>, %arg3: memref<256x1xf32, #tpu.memory_space<vmem>>, %arg4: memref<256x1xf32, #tpu.memory_space<vmem>>, %arg5: memref<256x196xf32, #tpu.memory_space<vmem>>) attributes {dimension_semantics = [#tpu.dimension_semantics<parallel>], iteration_bounds = array<i64: 4>, scalar_prefetch = 0 : i64, scratch_operands = 0 : i64, tpu.core_type = #tpu.core_type<tc>, window_params = [{pipeline_mode = #tpu.pipeline_mode<synchronous>, transform_indices = @transform_0, window_bounds = array<i64: 256, 196>}, {transform_indices = @transform_1, window_bounds = array<i64: 256, 256>}, {transform_indices = @transform_2, window_bounds = array<i64: 256, 1>}, {transform_indices = @transform_3, window_bounds = array<i64: 256, 1>}, {transform_indices = @transform_4, window_bounds = array<i64: 256, 196>}]} {
    %c0 = arith.constant 0 : index
    %c0_0 = arith.constant 0 : index
    %0 = vector.load %arg1[%c0, %c0_0] : memref<256x196xf32, #tpu.memory_space<vmem>>, vector<256x196xf32>
    %cst = arith.constant 0.000000e+00 : f32
    %1 = vector.broadcast %cst : f32 to vector<256x196xf32>
    %2 = arith.maximumf %0, %1 : vector<256x196xf32>
    %c0_1 = arith.constant 0 : index
    %c0_2 = arith.constant 0 : index
    %3 = vector.load %arg2[%c0_1, %c0_2] : memref<256x256xf32, #tpu.memory_space<vmem>>, vector<256x256xf32>
    %cst_3 = arith.constant dense<0.000000e+00> : vector<256x196xf32>
    %4 = tpu.matmul %3, %2, %cst_3 {dimension_numbers = #tpu.dot_dimension_numbers<[1], [0], [0], [1], [0, 0, 1, 1], [], []>} : vector<256x256xf32>, vector<256x196xf32>, vector<256x196xf32> -> vector<256x196xf32>
    %cst_4 = arith.constant 1.000000e+00 : f32
    %cst_5 = arith.constant 1.960000e+02 : f32
    %5 = arith.divf %cst_4, %cst_5 : f32
    %cst_6 = arith.constant dense<0.000000e+00> : vector<256xf32>
    %6 = vector.multi_reduction <add>, %4, %cst_6 [1] : vector<256x196xf32> to vector<256xf32>
    %7 = vector.shape_cast %6 : vector<256xf32> to vector<256x1xf32>
    %8 = arith.mulf %4, %4 : vector<256x196xf32>
    %cst_7 = arith.constant dense<0.000000e+00> : vector<256xf32>
    %9 = vector.multi_reduction <add>, %8, %cst_7 [1] : vector<256x196xf32> to vector<256xf32>
    %10 = vector.shape_cast %9 : vector<256xf32> to vector<256x1xf32>
    %11 = vector.broadcast %5 : f32 to vector<256x1xf32>
    %12 = arith.mulf %7, %11 : vector<256x1xf32>
    %13 = vector.broadcast %5 : f32 to vector<256x1xf32>
    %14 = arith.mulf %10, %13 : vector<256x1xf32>
    %15 = arith.mulf %12, %12 : vector<256x1xf32>
    %16 = arith.subf %14, %15 : vector<256x1xf32>
    %cst_8 = arith.constant 0.000000e+00 : f32
    %17 = vector.broadcast %cst_8 : f32 to vector<256x1xf32>
    %18 = arith.maximumf %16, %17 : vector<256x1xf32>
    %c0_9 = arith.constant 0 : index
    %c0_10 = arith.constant 0 : index
    %19 = vector.load %arg3[%c0_9, %c0_10] : memref<256x1xf32, #tpu.memory_space<vmem>>, vector<256x1xf32>
    %cst_11 = arith.constant 9.99999974E-6 : f32
    %20 = vector.broadcast %cst_11 : f32 to vector<256x1xf32>
    %21 = arith.addf %18, %20 : vector<256x1xf32>
    %22 = math.rsqrt %21 : vector<256x1xf32>
    %23 = arith.mulf %19, %22 : vector<256x1xf32>
    %c0_12 = arith.constant 0 : index
    %c0_13 = arith.constant 0 : index
    %24 = vector.load %arg4[%c0_12, %c0_13] : memref<256x1xf32, #tpu.memory_space<vmem>>, vector<256x1xf32>
    %25 = arith.mulf %12, %23 : vector<256x1xf32>
    %26 = arith.subf %24, %25 : vector<256x1xf32>
    %27 = vector.broadcast %23 : vector<256x1xf32> to vector<256x196xf32>
    %28 = arith.mulf %4, %27 : vector<256x196xf32>
    %29 = vector.broadcast %26 : vector<256x1xf32> to vector<256x196xf32>
    %30 = arith.addf %28, %29 : vector<256x196xf32>
    %c0_14 = arith.constant 0 : index
    %c0_15 = arith.constant 0 : index
    %31 = vector.load %arg5[%c0_14, %c0_15] : memref<256x196xf32, #tpu.memory_space<vmem>>, vector<256x196xf32>
    tpu.vector_store %arg5[%c0_14, %c0_15], %30 {strides = array<i32>} : memref<256x196xf32, #tpu.memory_space<vmem>>, vector<256x196xf32>,
    return
  }
  func.func @transform_0(%arg0: i32) -> (i32, i32) {
    %c0_i32 = arith.constant 0 : i32
    %c0_i32_0 = arith.constant 0 : i32
    %c0_i32_1 = arith.constant 0 : i32
    return %c0_i32, %c0_i32_0 : i32, i32
  }
  func.func @transform_1(%arg0: i32) -> (i32, i32) {
    %c0_i32 = arith.constant 0 : i32
    %c0_i32_0 = arith.constant 0 : i32
    return %arg0, %c0_i32 : i32, i32
  }
  func.func @transform_2(%arg0: i32) -> (i32, i32) {
    %c0_i32 = arith.constant 0 : i32
    %c0_i32_0 = arith.constant 0 : i32
    return %arg0, %c0_i32 : i32, i32
  }
  func.func @transform_3(%arg0: i32) -> (i32, i32) {
    %c0_i32 = arith.constant 0 : i32
    %c0_i32_0 = arith.constant 0 : i32
    return %arg0, %c0_i32 : i32, i32
  }
  func.func @transform_4(%arg0: i32) -> (i32, i32) {
    %c0_i32 = arith.constant 0 : i32
    %c0_i32_0 = arith.constant 0 : i32
    return %arg0, %c0_i32 : i32, i32
  }
}

</mosaic_0001>

<llo_original>
// kernel: tpu_custom_call.1
$region0: #{tpu_custom_call.1}
  #allocation0 [shape = 'u32[]', space=smem, size = 0x4, offset = 0x4, fixed_abs, tag = 'smem constant byte address 0x4 - core index']
  #allocation1 [shape = 'u32[144,128]{1,0:T(1,128)}', space=vmem, size = 0x12000, scoped, tag = 'internal scratch']
  %s0 = inlined_call_operand.vmem [shape: f32[256,196], index: 0, kind: input, shape index: {}]
  %s1 = inlined_call_operand.vmem [shape: f32[1024,256], index: 1, kind: input, shape index: {}]
  %s2 = inlined_call_operand.vmem [shape: f32[1024,1], index: 2, kind: input, shape index: {}]
  %s3 = inlined_call_operand.vmem [shape: f32[1024,1], index: 3, kind: input, shape index: {}]
  %s4 = inlined_call_operand.vmem [shape: f32[1024,196], index: 4, kind: output, shape index: {}]
  %s5 = sld [smem:[#allocation0]]
  $region49: #{tpu_custom_call.1} parent=0
    _
  %s7 = ssub.s32 1, %s5
  %s8 = scalar_select 0, %s7, %s5
  loop: start=0, step=1, limit=6
  $region2: #{tpu_custom_call.1} parent=0 // loop_pre_header
    _
  $region3: #{tpu_custom_call.1} parent=0 // loop_header
    %s10 = sphi 0, %s14
    %p11 = scmp.ge.s32.totalorder %s10, 6
    %s18 = sphi 0, %s18
    %s20 = sphi 0, %s18
    %s21 = sphi 0, %s20
    %s35 = sphi 0, %s21
    %s41 = sphi 0, %s43
    %s44 = sphi 0, %s41
    %s45 = sphi 0, %s44
    %s61 = sphi 0, %s45
    %s67 = sphi 0, %s69
    %s70 = sphi 0, %s67
    %s71 = sphi 0, %s70
    %s87 = sphi 0, %s71
    %s93 = sphi 0, %s95
    %s96 = sphi 0, %s93
    %s97 = sphi 0, %s96
    %s113 = sphi 0, %s97
    %s119 = sphi 0, %s121
    %s122 = sphi 0, %s119
    %s123 = sphi 0, %s122
    %s139 = sphi 0, %s123
  $region4: #{tpu_custom_call.1} parent=0 // loop_header_branch
    %13 = sbr.rel (%p11) target = $region8
  $region5: #{tpu_custom_call.1} parent=0 // loop_body
    %s15 = ssub.s32 %s10, 1
    %s16 = ssub.s32 %s10, 2
    %s17 = sadd.s32 %s10, 1
    %s19 = sadd.s32 %s18, 1
    %p22 = scmp.eq.s32.totalorder %s10, 3
    %p23 = scmp.ne.s32.totalorder %s18, %s20
    %p24 = scmp.eq.s32.totalorder %s10, 0
    %p25 = por %p23, %p24
    %p26 = scmp.ne.s32.totalorder %s18, %s20
    %p27 = scmp.eq.s32.totalorder %s15, 3
    %p28 = por %p26, %p27
    %p29 = scmp.ne.s32.totalorder %s20, %s21
    %p30 = scmp.eq.s32.totalorder %s15, 0
    %p31 = por %p29, %p30
    %p32 = scmp.ne.s32.totalorder %s20, %s21
    %p33 = scmp.eq.s32.totalorder %s16, 3
    %p34 = por %p32, %p33
    %p36 = scmp.ne.s32.totalorder %s21, %s35
    %p37 = scmp.eq.s32.totalorder %s16, 0
    %p38 = por %p36, %p37
    %s39 = ssub.s32 %s10, %s17
    %p40 = scmp.eq.s32.totalorder %s39, 0
    %s42 = sadd.s32 %s41, 1
    %s43 = scalar_select %p40, %s41, %s42
    %p46 = pneg %p40
    %p47 = scmp.eq.s32.totalorder %s10, 3
    %p48 = por %p46, %p47
    %p49 = scmp.ne.s32.totalorder %s41, %s44
    %p50 = scmp.eq.s32.totalorder %s10, 0
    %p51 = por %p49, %p50
    %p52 = scmp.ne.s32.totalorder %s41, %s44
    %p53 = scmp.eq.s32.totalorder %s15, 3
    %p54 = por %p52, %p53
    %p55 = scmp.ne.s32.totalorder %s44, %s45
    %p56 = scmp.eq.s32.totalorder %s15, 0
    %p57 = por %p55, %p56
    %p58 = scmp.ne.s32.totalorder %s44, %s45
    %p59 = scmp.eq.s32.totalorder %s16, 3
    %p60 = por %p58, %p59
    %p62 = scmp.ne.s32.totalorder %s45, %s61
    %p63 = scmp.eq.s32.totalorder %s16, 0
    %p64 = por %p62, %p63
    %s65 = ssub.s32 %s10, %s17
    %p66 = scmp.eq.s32.totalorder %s65, 0
    %s68 = sadd.s32 %s67, 1
    %s69 = scalar_select %p66, %s67, %s68
    %p72 = pneg %p66
    %p73 = scmp.eq.s32.totalorder %s10, 3
    %p74 = por %p72, %p73
    %p75 = scmp.ne.s32.totalorder %s67, %s70
    %p76 = scmp.eq.s32.totalorder %s10, 0
    %p77 = por %p75, %p76
    %p78 = scmp.ne.s32.totalorder %s67, %s70
    %p79 = scmp.eq.s32.totalorder %s15, 3
    %p80 = por %p78, %p79
    %p81 = scmp.ne.s32.totalorder %s70, %s71
    %p82 = scmp.eq.s32.totalorder %s15, 0
    %p83 = por %p81, %p82
    %p84 = scmp.ne.s32.totalorder %s70, %s71
    %p85 = scmp.eq.s32.totalorder %s16, 3
    %p86 = por %p84, %p85
    %p88 = scmp.ne.s32.totalorder %s71, %s87
    %p89 = scmp.eq.s32.totalorder %s16, 0
    %p90 = por %p88, %p89
    %s91 = ssub.s32 %s10, %s17
    %p92 = scmp.eq.s32.totalorder %s91, 0
    %s94 = sadd.s32 %s93, 1
    %s95 = scalar_select %p92, %s93, %s94
    %p98 = pneg %p92
    %p99 = scmp.eq.s32.totalorder %s10, 3
    %p100 = por %p98, %p99
    %p101 = scmp.ne.s32.totalorder %s93, %s96
    %p102 = scmp.eq.s32.totalorder %s10, 0
    %p103 = por %p101, %p102
    %p104 = scmp.ne.s32.totalorder %s93, %s96
    %p105 = scmp.eq.s32.totalorder %s15, 3
    %p106 = por %p104, %p105
    %p107 = scmp.ne.s32.totalorder %s96, %s97
    %p108 = scmp.eq.s32.totalorder %s15, 0
    %p109 = por %p107, %p108
    %p110 = scmp.ne.s32.totalorder %s96, %s97
    %p111 = scmp.eq.s32.totalorder %s16, 3
    %p112 = por %p110, %p111
    %p114 = scmp.ne.s32.totalorder %s97, %s113
    %p115 = scmp.eq.s32.totalorder %s16, 0
    %p116 = por %p114, %p115
    %s117 = ssub.s32 %s10, %s17
    %p118 = scmp.eq.s32.totalorder %s117, 0
    %s120 = sadd.s32 %s119, 1
    %s121 = scalar_select %p118, %s119, %s120
    %p124 = pneg %p118
    %p125 = scmp.eq.s32.totalorder %s10, 3
    %p126 = por %p124, %p125
    %p127 = scmp.ne.s32.totalorder %s119, %s122
    %p128 = scmp.eq.s32.totalorder %s10, 0
    %p129 = por %p127, %p128
    %p130 = scmp.ne.s32.totalorder %s119, %s122
    %p131 = scmp.eq.s32.totalorder %s15, 3
    %p132 = por %p130, %p131
    %p133 = scmp.ne.s32.totalorder %s122, %s123
    %p134 = scmp.eq.s32.totalorder %s15, 0
    %p135 = por %p133, %p134
    %p136 = scmp.ne.s32.totalorder %s122, %s123
    %p137 = scmp.eq.s32.totalorder %s16, 3
    %p138 = por %p136, %p137
    %p140 = scmp.ne.s32.totalorder %s123, %s139
    %p141 = scmp.eq.s32.totalorder %s16, 0
    %p142 = por %p140, %p141
    %p143 = scmp.le.s32.totalorder 1, %s10
    %p144 = scmp.lt.s32.totalorder %s10, 5
    %p145 = pnand %p143, %p144
    %p146 = pneg %p145
    // Predicated region
    $region9: #{tpu_custom_call.1} parent=5 // pred_check
      _
    $region10: #{tpu_custom_call.1} parent=5 // pred_check_branch
      %148 = sbr.rel (%p145) target = $region12
    $region11: #{tpu_custom_call.1} parent=5 // pred_region
      %s149 = ssub.s32 %s10, 1
      // Predicated region
      $region13: #{tpu_custom_call.1} parent=11 // pred_check
        %p150 = pneg %p31
      $region14: #{tpu_custom_call.1} parent=11 // pred_check_branch
        %152 = sbr.rel (%p150) target = $region16
      $region15: #{tpu_custom_call.1} parent=11 // pred_region
        _
      $region16: #{tpu_custom_call.1} parent=11 // pred_fallthru
        _
    $region12: #{tpu_custom_call.1} parent=5 // pred_fallthru
      _
    %p153 = scmp.lt.s32.totalorder %s10, 4
    // Predicated region
    $region17: #{tpu_custom_call.1} parent=5 // pred_check
      %p154 = pneg %p153
    $region18: #{tpu_custom_call.1} parent=5 // pred_check_branch
      %156 = sbr.rel (%p154) target = $region20
    $region19: #{tpu_custom_call.1} parent=5 // pred_region
      // Predicated region
      $region21: #{tpu_custom_call.1} parent=19 // pred_check
        %p157 = pneg %p51
      $region22: #{tpu_custom_call.1} parent=19 // pred_check_branch
        %159 = sbr.rel (%p157) target = $region24
      $region23: #{tpu_custom_call.1} parent=19 // pred_region
        %s160 = smul.u32 32, %s10
        %p161 = scmp.lt.s32.totalorder %s160, 127
        %s162 = scalar_select %p161, %s160, 127
        %s163 = smul.addr %s162, 2
        %s164 = smul.addr %s163, 8
        %s165 = scalar_lea.vmem %s1, %s164
        %s166 = smul.u32 32, %s10
      $region24: #{tpu_custom_call.1} parent=19 // pred_fallthru
        _
      // Predicated region
      $region25: #{tpu_custom_call.1} parent=19 // pred_check
        %p167 = pneg %p77
      $region26: #{tpu_custom_call.1} parent=19 // pred_check_branch
        %169 = sbr.rel (%p167) target = $region28
      $region27: #{tpu_custom_call.1} parent=19 // pred_region
        %s170 = smul.u32 32, %s10
        %p171 = scmp.lt.s32.totalorder %s170, 127
        %s172 = scalar_select %p171, %s170, 127
        %s173 = smul.addr %s172, 8
        %s174 = scalar_lea.vmem %s2, %s173
        %s175 = smul.u32 32, %s10
      $region28: #{tpu_custom_call.1} parent=19 // pred_fallthru
        _
      // Predicated region
      $region29: #{tpu_custom_call.1} parent=19 // pred_check
        %p176 = pneg %p103
      $region30: #{tpu_custom_call.1} parent=19 // pred_check_branch
        %178 = sbr.rel (%p176) target = $region32
      $region31: #{tpu_custom_call.1} parent=19 // pred_region
        %s179 = smul.u32 32, %s10
        %p180 = scmp.lt.s32.totalorder %s179, 127
        %s181 = scalar_select %p180, %s179, 127
        %s182 = smul.addr %s181, 8
        %s183 = scalar_lea.vmem %s3, %s182
        %s184 = smul.u32 32, %s10
      $region32: #{tpu_custom_call.1} parent=19 // pred_fallthru
        _
    $region20: #{tpu_custom_call.1} parent=5 // pred_fallthru
      _
    %p185 = scmp.le.s32.totalorder 1, %s10
    %p186 = scmp.lt.s32.totalorder %s10, 5
    %p187 = pnand %p185, %p186
    %p188 = pneg %p187
    // Predicated region
    $region33: #{tpu_custom_call.1} parent=5 // pred_check
      _
    $region34: #{tpu_custom_call.1} parent=5 // pred_check_branch
      %190 = sbr.rel (%p187) target = $region36
    $region35: #{tpu_custom_call.1} parent=5 // pred_region
      %s191 = ssub.s32 %s10, 1
      %p192 = pneg %p31
      %p193 = pneg %p28
      %s194 = smul.u32 32, %s15
      %p195 = scmp.lt.s32.totalorder %s194, 127
      %s196 = scalar_select %p195, %s194, 127
      %s197 = smul.addr %s196, 2
      %s198 = smul.addr %s197, 8
      %s199 = scalar_lea.vmem %s1, %s198
      %p200 = pneg %p57
      %p201 = pneg %p54
      %s202 = smul.u32 32, %s15
      %p203 = scmp.lt.s32.totalorder %s202, 127
      %s204 = scalar_select %p203, %s202, 127
      %s205 = smul.addr %s204, 8
      %s206 = scalar_lea.vmem %s2, %s205
      %p207 = pneg %p83
      %p208 = pneg %p80
      %s209 = smul.u32 32, %s15
      %p210 = scmp.lt.s32.totalorder %s209, 127
      %s211 = scalar_select %p210, %s209, 127
      %s212 = smul.addr %s211, 8
      %s213 = scalar_lea.vmem %s3, %s212
      %p214 = pneg %p109
      %p215 = pneg %p106
      %p216 = pneg %p135
      %p217 = pneg %p132
      %s218 = smul.u32 32, %s15
      %p219 = scmp.lt.s32.totalorder %s218, 127
      %s220 = scalar_select %p219, %s218, 127
      %s221 = smul.addr %s220, 2
      %s222 = smul.addr %s221, 8
      %s223 = scalar_lea.vmem %s4, %s222
      %s224 = smul.u32 32, %s15
      %p225 = scmp.lt.s32.totalorder %s224, 127
      %s226 = scalar_select %p225, %s224, 127
      %s227 = smul.addr %s226, 2
      %s228 = smul.addr %s227, 8
      %s229 = scalar_lea.vmem %s1, %s228
      %s230 = smul.u32 32, %s15
      %s231 = smul.u32 32, %s15
      %p232 = scmp.lt.s32.totalorder %s231, 127
      %s233 = scalar_select %p232, %s231, 127
      %s234 = smul.addr %s233, 8
      %s235 = scalar_lea.vmem %s2, %s234
      %s236 = smul.u32 32, %s15
      %s237 = smul.u32 32, %s15
      %p238 = scmp.lt.s32.totalorder %s237, 127
      %s239 = scalar_select %p238, %s237, 127
      %s240 = smul.addr %s239, 8
      %s241 = scalar_lea.vmem %s3, %s240
      %s242 = smul.u32 32, %s15
      %s243 = smul.u32 32, %s15
      %p244 = scmp.lt.s32.totalorder %s243, 127
      %s245 = scalar_select %p244, %s243, 127
      %s246 = smul.addr %s245, 2
      %s247 = smul.addr %s246, 8
      %s248 = scalar_lea.vmem %s4, %s247
      %s249 = smul.u32 32, %s15
      %v250 = vld [vmem:[%s0] sm:$0xff]
      %v251 = vld [vmem:[%s0 + $0x8] sm:$0xff]
      %v252 = vld [vmem:[%s0 + $0x10] sm:$0xff]
      %v253 = vld [vmem:[%s0 + $0x18] sm:$0xff]
      %v254 = vld [vmem:[%s0 + $0x20] sm:$0xff]
      %v255 = vld [vmem:[%s0 + $0x28] sm:$0xff]
      %v256 = vld [vmem:[%s0 + $0x30] sm:$0xff]
      %v257 = vld [vmem:[%s0 + $0x38] sm:$0xff]
      %v258 = vld [vmem:[%s0 + $0x40] sm:$0xff]
      %v259 = vld [vmem:[%s0 + $0x48] sm:$0xff]
      %v260 = vld [vmem:[%s0 + $0x50] sm:$0xff]
      %v261 = vld [vmem:[%s0 + $0x58] sm:$0xff]
      %v262 = vld [vmem:[%s0 + $0x60] sm:$0xff]
      %v263 = vld [vmem:[%s0 + $0x68] sm:$0xff]
      %v264 = vld [vmem:[%s0 + $0x70] sm:$0xff]
      %v265 = vld [vmem:[%s0 + $0x78] sm:$0xff]
      %v266 = vld [vmem:[%s0 + $0x80] sm:$0xff]
      %v267 = vld [vmem:[%s0 + $0x88] sm:$0xff]
      %v268 = vld [vmem:[%s0 + $0x90] sm:$0xff]
      %v269 = vld [vmem:[%s0 + $0x98] sm:$0xff]
      %v270 = vld [vmem:[%s0 + $0xa0] sm:$0xff]
      %v271 = vld [vmem:[%s0 + $0xa8] sm:$0xff]
      %v272 = vld [vmem:[%s0 + $0xb0] sm:$0xff]
      %v273 = vld [vmem:[%s0 + $0xb8] sm:$0xff]
      %v274 = vld [vmem:[%s0 + $0xc0] sm:$0xff]
      %v275 = vld [vmem:[%s0 + $0xc8] sm:$0xff]
      %v276 = vld [vmem:[%s0 + $0xd0] sm:$0xff]
      %v277 = vld [vmem:[%s0 + $0xd8] sm:$0xff]
      %v278 = vld [vmem:[%s0 + $0xe0] sm:$0xff]
      %v279 = vld [vmem:[%s0 + $0xe8] sm:$0xff]
      %v280 = vld [vmem:[%s0 + $0xf0] sm:$0xff]
      %v281 = vld [vmem:[%s0 + $0xf8] sm:$0xff]
      %v282 = vld [vmem:[%s0 + $0x100] sm:$0xff]
      %v283 = vld [vmem:[%s0 + $0x108] sm:$0xff]
      %v284 = vld [vmem:[%s0 + $0x110] sm:$0xff]
      %v285 = vld [vmem:[%s0 + $0x118] sm:$0xff]
      %v286 = vld [vmem:[%s0 + $0x120] sm:$0xff]
      %v287 = vld [vmem:[%s0 + $0x128] sm:$0xff]
      %v288 = vld [vmem:[%s0 + $0x130] sm:$0xff]
      %v289 = vld [vmem:[%s0 + $0x138] sm:$0xff]
      %v290 = vld [vmem:[%s0 + $0x140] sm:$0xff]
      %v291 = vld [vmem:[%s0 + $0x148] sm:$0xff]
      %v292 = vld [vmem:[%s0 + $0x150] sm:$0xff]
      %v293 = vld [vmem:[%s0 + $0x158] sm:$0xff]
      %v294 = vld [vmem:[%s0 + $0x160] sm:$0xff]
      %v295 = vld [vmem:[%s0 + $0x168] sm:$0xff]
      %v296 = vld [vmem:[%s0 + $0x170] sm:$0xff]
      %v297 = vld [vmem:[%s0 + $0x178] sm:$0xff]
      %v298 = vld [vmem:[%s0 + $0x180] sm:$0xff]
      %v299 = vld [vmem:[%s0 + $0x188] sm:$0xff]
      %v300 = vld [vmem:[%s0 + $0x190] sm:$0xff]
      %v301 = vld [vmem:[%s0 + $0x198] sm:$0xff]
      %v302 = vld [vmem:[%s0 + $0x1a0] sm:$0xff]
      %v303 = vld [vmem:[%s0 + $0x1a8] sm:$0xff]
      %v304 = vld [vmem:[%s0 + $0x1b0] sm:$0xff]
      %v305 = vld [vmem:[%s0 + $0x1b8] sm:$0xff]
      %v306 = vld [vmem:[%s0 + $0x1c0] sm:$0xff]
      %v307 = vld [vmem:[%s0 + $0x1c8] sm:$0xff]
      %v308 = vld [vmem:[%s0 + $0x1d0] sm:$0xff]
      %v309 = vld [vmem:[%s0 + $0x1d8] sm:$0xff]
      %v310 = vld [vmem:[%s0 + $0x1e0] sm:$0xff]
      %v311 = vld [vmem:[%s0 + $0x1e8] sm:$0xff]
      %v312 = vld [vmem:[%s0 + $0x1f0] sm:$0xff]
      %v313 = vld [vmem:[%s0 + $0x1f8] sm:$0xff]
      %v314 = vmax.f32 %v250, 0.0
      %v315 = vmax.f32 %v251, 0.0
      %v316 = vmax.f32 %v252, 0.0
      %v317 = vmax.f32 %v253, 0.0
      %v318 = vmax.f32 %v254, 0.0
      %v319 = vmax.f32 %v255, 0.0
      %v320 = vmax.f32 %v256, 0.0
      %v321 = vmax.f32 %v257, 0.0
      %v322 = vmax.f32 %v258, 0.0
      %v323 = vmax.f32 %v259, 0.0
      %v324 = vmax.f32 %v260, 0.0
      %v325 = vmax.f32 %v261, 0.0
      %v326 = vmax.f32 %v262, 0.0
      %v327 = vmax.f32 %v263, 0.0
      %v328 = vmax.f32 %v264, 0.0
      %v329 = vmax.f32 %v265, 0.0
      %v330 = vmax.f32 %v266, 0.0
      %v331 = vmax.f32 %v267, 0.0
      %v332 = vmax.f32 %v268, 0.0
      %v333 = vmax.f32 %v269, 0.0
      %v334 = vmax.f32 %v270, 0.0
      %v335 = vmax.f32 %v271, 0.0
      %v336 = vmax.f32 %v272, 0.0
      %v337 = vmax.f32 %v273, 0.0
      %v338 = vmax.f32 %v274, 0.0
      %v339 = vmax.f32 %v275, 0.0
      %v340 = vmax.f32 %v276, 0.0
      %v341 = vmax.f32 %v277, 0.0
      %v342 = vmax.f32 %v278, 0.0
      %v343 = vmax.f32 %v279, 0.0
      %v344 = vmax.f32 %v280, 0.0
      %v345 = vmax.f32 %v281, 0.0
      %v346 = vmax.f32 %v282, 0.0
      %v347 = vmax.f32 %v283, 0.0
      %v348 = vmax.f32 %v284, 0.0
      %v349 = vmax.f32 %v285, 0.0
      %v350 = vmax.f32 %v286, 0.0
      %v351 = vmax.f32 %v287, 0.0
      %v352 = vmax.f32 %v288, 0.0
      %v353 = vmax.f32 %v289, 0.0
      %v354 = vmax.f32 %v290, 0.0
      %v355 = vmax.f32 %v291, 0.0
      %v356 = vmax.f32 %v292, 0.0
      %v357 = vmax.f32 %v293, 0.0
      %v358 = vmax.f32 %v294, 0.0
      %v359 = vmax.f32 %v295, 0.0
      %v360 = vmax.f32 %v296, 0.0
      %v361 = vmax.f32 %v297, 0.0
      %v362 = vmax.f32 %v298, 0.0
      %v363 = vmax.f32 %v299, 0.0
      %v364 = vmax.f32 %v300, 0.0
      %v365 = vmax.f32 %v301, 0.0
      %v366 = vmax.f32 %v302, 0.0
      %v367 = vmax.f32 %v303, 0.0
      %v368 = vmax.f32 %v304, 0.0
      %v369 = vmax.f32 %v305, 0.0
      %v370 = vmax.f32 %v306, 0.0
      %v371 = vmax.f32 %v307, 0.0
      %v372 = vmax.f32 %v308, 0.0
      %v373 = vmax.f32 %v309, 0.0
      %v374 = vmax.f32 %v310, 0.0
      %v375 = vmax.f32 %v311, 0.0
      %v376 = vmax.f32 %v312, 0.0
      %v377 = vmax.f32 %v313, 0.0
      %v378 = vld [vmem:[%s229] sm:$0xff]
      %v379 = vld [vmem:[%s229 + $0x8] sm:$0xff]
      %v380 = vld [vmem:[%s229 + $0x10] sm:$0xff]
      %v381 = vld [vmem:[%s229 + $0x18] sm:$0xff]
      %v382 = vld [vmem:[%s229 + $0x20] sm:$0xff]
      %v383 = vld [vmem:[%s229 + $0x28] sm:$0xff]
      %v384 = vld [vmem:[%s229 + $0x30] sm:$0xff]
      %v385 = vld [vmem:[%s229 + $0x38] sm:$0xff]
      %v386 = vld [vmem:[%s229 + $0x40] sm:$0xff]
      %v387 = vld [vmem:[%s229 + $0x48] sm:$0xff]
      %v388 = vld [vmem:[%s229 + $0x50] sm:$0xff]
      %v389 = vld [vmem:[%s229 + $0x58] sm:$0xff]
      %v390 = vld [vmem:[%s229 + $0x60] sm:$0xff]
      %v391 = vld [vmem:[%s229 + $0x68] sm:$0xff]
      %v392 = vld [vmem:[%s229 + $0x70] sm:$0xff]
      %v393 = vld [vmem:[%s229 + $0x78] sm:$0xff]
      %v394 = vld [vmem:[%s229 + $0x80] sm:$0xff]
      %v395 = vld [vmem:[%s229 + $0x88] sm:$0xff]
      %v396 = vld [vmem:[%s229 + $0x90] sm:$0xff]
      %v397 = vld [vmem:[%s229 + $0x98] sm:$0xff]
      %v398 = vld [vmem:[%s229 + $0xa0] sm:$0xff]
      %v399 = vld [vmem:[%s229 + $0xa8] sm:$0xff]
      %v400 = vld [vmem:[%s229 + $0xb0] sm:$0xff]
      %v401 = vld [vmem:[%s229 + $0xb8] sm:$0xff]
      %v402 = vld [vmem:[%s229 + $0xc0] sm:$0xff]
      %v403 = vld [vmem:[%s229 + $0xc8] sm:$0xff]
      %v404 = vld [vmem:[%s229 + $0xd0] sm:$0xff]
      %v405 = vld [vmem:[%s229 + $0xd8] sm:$0xff]
      %v406 = vld [vmem:[%s229 + $0xe0] sm:$0xff]
      %v407 = vld [vmem:[%s229 + $0xe8] sm:$0xff]
      %v408 = vld [vmem:[%s229 + $0xf0] sm:$0xff]
      %v409 = vld [vmem:[%s229 + $0xf8] sm:$0xff]
      %v410 = vld [vmem:[%s229 + $0x100] sm:$0xff]
      %v411 = vld [vmem:[%s229 + $0x108] sm:$0xff]
      %v412 = vld [vmem:[%s229 + $0x110] sm:$0xff]
      %v413 = vld [vmem:[%s229 + $0x118] sm:$0xff]
      %v414 = vld [vmem:[%s229 + $0x120] sm:$0xff]
      %v415 = vld [vmem:[%s229 + $0x128] sm:$0xff]
      %v416 = vld [vmem:[%s229 + $0x130] sm:$0xff]
      %v417 = vld [vmem:[%s229 + $0x138] sm:$0xff]
      %v418 = vld [vmem:[%s229 + $0x140] sm:$0xff]
      %v419 = vld [vmem:[%s229 + $0x148] sm:$0xff]
      %v420 = vld [vmem:[%s229 + $0x150] sm:$0xff]
      %v421 = vld [vmem:[%s229 + $0x158] sm:$0xff]
      %v422 = vld [vmem:[%s229 + $0x160] sm:$0xff]
      %v423 = vld [vmem:[%s229 + $0x168] sm:$0xff]
      %v424 = vld [vmem:[%s229 + $0x170] sm:$0xff]
      %v425 = vld [vmem:[%s229 + $0x178] sm:$0xff]
      %v426 = vld [vmem:[%s229 + $0x180] sm:$0xff]
      %v427 = vld [vmem:[%s229 + $0x188] sm:$0xff]
      %v428 = vld [vmem:[%s229 + $0x190] sm:$0xff]
      %v429 = vld [vmem:[%s229 + $0x198] sm:$0xff]
      %v430 = vld [vmem:[%s229 + $0x1a0] sm:$0xff]
      %v431 = vld [vmem:[%s229 + $0x1a8] sm:$0xff]
      %v432 = vld [vmem:[%s229 + $0x1b0] sm:$0xff]
      %v433 = vld [vmem:[%s229 + $0x1b8] sm:$0xff]
      %v434 = vld [vmem:[%s229 + $0x1c0] sm:$0xff]
      %v435 = vld [vmem:[%s229 + $0x1c8] sm:$0xff]
      %v436 = vld [vmem:[%s229 + $0x1d0] sm:$0xff]
      %v437 = vld [vmem:[%s229 + $0x1d8] sm:$0xff]
      %v438 = vld [vmem:[%s229 + $0x1e0] sm:$0xff]
      %v439 = vld [vmem:[%s229 + $0x1e8] sm:$0xff]
      %v440 = vld [vmem:[%s229 + $0x1f0] sm:$0xff]
      %v441 = vld [vmem:[%s229 + $0x1f8] sm:$0xff]
      %442 = vmatprep.subr.mxu0 %v315
      %443 = vmatpush1.msra.mxu0 %v314
      %444 = vmatprep.subr.mxu0 %v317
      %445 = vmatpush1.msra.mxu0 %v316
      %446 = vmatprep.subr.mxu0 %v319
      %447 = vmatpush1.msra.mxu0 %v318
      %448 = vmatprep.subr.mxu0 %v321
      %449 = vmatpush1.msra.mxu0 %v320
      %450 = vmatprep.subr.mxu0 %v323
      %451 = vmatpush1.msra.mxu0 %v322
      %452 = vmatprep.subr.mxu0 %v325
      %453 = vmatpush1.msra.mxu0 %v324
      %454 = vmatprep.subr.mxu0 %v327
      %455 = vmatpush1.msra.mxu0 %v326
      %456 = vmatprep.subr.mxu0 %v329
      %457 = vmatpush1.msra.mxu0 %v328
      %458 = vmatprep.subr.mxu0 %v331
      %459 = vmatpush1.msra.mxu0 %v330
      %460 = vmatprep.subr.mxu0 %v333
      %461 = vmatpush1.msra.mxu0 %v332
      %462 = vmatprep.subr.mxu0 %v335
      %463 = vmatpush1.msra.mxu0 %v334
      %464 = vmatprep.subr.mxu0 %v337
      %465 = vmatpush1.msra.mxu0 %v336
      %466 = vmatprep.subr.mxu0 %v339
      %467 = vmatpush1.msra.mxu0 %v338
      %468 = vmatprep.subr.mxu0 %v341
      %469 = vmatpush1.msra.mxu0 %v340
      %470 = vmatprep.subr.mxu0 %v343
      %471 = vmatpush1.msra.mxu0 %v342
      %472 = vmatprep.subr.mxu0 %v345
      %473 = vmatpush1.msra.mxu0 %v344
      %474 = vmatprep.subr.mxu0 %v347
      %475 = vmatpush1.msra.mxu0 %v346
      %476 = vmatprep.subr.mxu0 %v349
      %477 = vmatpush1.msra.mxu0 %v348
      %478 = vmatprep.subr.mxu0 %v351
      %479 = vmatpush1.msra.mxu0 %v350
      %480 = vmatprep.subr.mxu0 %v353
      %481 = vmatpush1.msra.mxu0 %v352
      %482 = vmatprep.subr.mxu0 %v355
      %483 = vmatpush1.msra.mxu0 %v354
      %484 = vmatprep.subr.mxu0 %v357
      %485 = vmatpush1.msra.mxu0 %v356
      %486 = vmatprep.subr.mxu0 %v359
      %487 = vmatpush1.msra.mxu0 %v358
      %488 = vmatprep.subr.mxu0 %v361
      %489 = vmatpush1.msra.mxu0 %v360
      %490 = vmatprep.subr.mxu0 %v363
      %491 = vmatpush1.msra.mxu0 %v362
      %492 = vmatprep.subr.mxu0 %v365
      %493 = vmatpush1.msra.mxu0 %v364
      %494 = vmatprep.subr.mxu0 %v367
      %495 = vmatpush1.msra.mxu0 %v366
      %496 = vmatprep.subr.mxu0 %v369
      %497 = vmatpush1.msra.mxu0 %v368
      %498 = vmatprep.subr.mxu0 %v371
      %499 = vmatpush1.msra.mxu0 %v370
      %500 = vmatprep.subr.mxu0 %v373
      %501 = vmatpush1.msra.mxu0 %v372
      %502 = vmatprep.subr.mxu0 %v375
      %503 = vmatpush1.msra.mxu0 %v374
      %504 = vmatprep.subr.mxu0 %v377
      %505 = vmatpush1.msra.mxu0 %v376
      %506 = vmatprep.mubr.f32.mxu0 %v379
      %507 = vmatmul.mubr.f32.gmra.mrb[0].mxu0 %v378
      %v508 = vpop.f32.mrb[0].mxu0
      %v509 = vadd.f32 0.0, %v508
      %v510 = vpop.f32.mrb[0].mxu0
      %v511 = vadd.f32 0.0, %v510
      %512 = vmatprep.mubr.f32.mxu0 %v381
      %513 = vmatmul.mubr.f32.gmra.mrb[0].mxu0 %v380
      %v514 = vpop.f32.mrb[0].mxu0
      %v515 = vadd.f32 0.0, %v514
      %v516 = vpop.f32.mrb[0].mxu0
      %v517 = vadd.f32 0.0, %v516
      %518 = vmatprep.mubr.f32.mxu0 %v383
      %519 = vmatmul.mubr.f32.gmra.mrb[0].mxu0 %v382
      %v520 = vpop.f32.mrb[0].mxu0
      %v521 = vadd.f32 0.0, %v520
      %v522 = vpop.f32.mrb[0].mxu0
      %v523 = vadd.f32 0.0, %v522
      %524 = vmatprep.mubr.f32.mxu0 %v385
      %525 = vmatmul.mubr.f32.gmra.mrb[0].mxu0 %v384
      %v526 = vpop.f32.mrb[0].mxu0
      %v527 = vadd.f32 0.0, %v526
      %v528 = vpop.f32.mrb[0].mxu0
      %v529 = vadd.f32 0.0, %v528
      %530 = vmatprep.mubr.f32.mxu0 %v387
      %531 = vmatmul.mubr.f32.gmra.mrb[0].mxu0 %v386
      %v532 = vpop.f32.mrb[0].mxu0
      %v533 = vadd.f32 0.0, %v532
      %v534 = vpop.f32.mrb[0].mxu0
      %v535 = vadd.f32 0.0, %v534
      %536 = vmatprep.mubr.f32.mxu0 %v389
      %537 = vmatmul.mubr.f32.gmra.mrb[0].mxu0 %v388
      %v538 = vpop.f32.mrb[0].mxu0
      %v539 = vadd.f32 0.0, %v538
      %v540 = vpop.f32.mrb[0].mxu0
      %v541 = vadd.f32 0.0, %v540
      %542 = vmatprep.mubr.f32.mxu0 %v391
      %543 = vmatmul.mubr.f32.gmra.mrb[0].mxu0 %v390
      %v544 = vpop.f32.mrb[0].mxu0
      %v545 = vadd.f32 0.0, %v544
      %v546 = vpop.f32.mrb[0].mxu0
      %v547 = vadd.f32 0.0, %v546
      %548 = vmatprep.mubr.f32.mxu0 %v393
      %549 = vmatmul.mubr.f32.gmra.mrb[0].mxu0 %v392
      %v550 = vpop.f32.mrb[0].mxu0
      %v551 = vadd.f32 0.0, %v550
      %v552 = vpop.f32.mrb[0].mxu0
      %v553 = vadd.f32 0.0, %v552
      %554 = vmatprep.mubr.f32.mxu0 %v395
      %555 = vmatmul.mubr.f32.gmra.mrb[0].mxu0 %v394
      %v556 = vpop.f32.mrb[0].mxu0
      %v557 = vadd.f32 0.0, %v556
      %v558 = vpop.f32.mrb[0].mxu0
      %v559 = vadd.f32 0.0, %v558
      %560 = vmatprep.mubr.f32.mxu0 %v397
      %561 = vmatmul.mubr.f32.gmra.mrb[0].mxu0 %v396
      %v562 = vpop.f32.mrb[0].mxu0
      %v563 = vadd.f32 0.0, %v562
      %v564 = vpop.f32.mrb[0].mxu0
      %v565 = vadd.f32 0.0, %v564
      %566 = vmatprep.mubr.f32.mxu0 %v399
      %567 = vmatmul.mubr.f32.gmra.mrb[0].mxu0 %v398
      %v568 = vpop.f32.mrb[0].mxu0
      %v569 = vadd.f32 0.0, %v568
      %v570 = vpop.f32.mrb[0].mxu0
      %v571 = vadd.f32 0.0, %v570
      %572 = vmatprep.mubr.f32.mxu0 %v401
      %573 = vmatmul.mubr.f32.gmra.mrb[0].mxu0 %v400
      %v574 = vpop.f32.mrb[0].mxu0
      %v575 = vadd.f32 0.0, %v574
      %v576 = vpop.f32.mrb[0].mxu0
      %v577 = vadd.f32 0.0, %v576
      %578 = vmatprep.mubr.f32.mxu0 %v403
      %579 = vmatmul.mubr.f32.gmra.mrb[0].mxu0 %v402
      %v580 = vpop.f32.mrb[0].mxu0
      %v581 = vadd.f32 0.0, %v580
      %v582 = vpop.f32.mrb[0].mxu0
      %v583 = vadd.f32 0.0, %v582
      %584 = vmatprep.mubr.f32.mxu0 %v405
      %585 = vmatmul.mubr.f32.gmra.mrb[0].mxu0 %v404
      %v586 = vpop.f32.mrb[0].mxu0
      %v587 = vadd.f32 0.0, %v586
      %v588 = vpop.f32.mrb[0].mxu0
      %v589 = vadd.f32 0.0, %v588
      %590 = vmatprep.mubr.f32.mxu0 %v407
      %591 = vmatmul.mubr.f32.gmra.mrb[0].mxu0 %v406
      %v592 = vpop.f32.mrb[0].mxu0
      %v593 = vadd.f32 0.0, %v592
      %v594 = vpop.f32.mrb[0].mxu0
      %v595 = vadd.f32 0.0, %v594
      %596 = vmatprep.mubr.f32.mxu0 %v409
      %597 = vmatmul.mubr.f32.gmra.mrb[0].mxu0 %v408
      %v598 = vpop.f32.mrb[0].mxu0
      %v599 = vadd.f32 0.0, %v598
      %v600 = vpop.f32.mrb[0].mxu0
      %v601 = vadd.f32 0.0, %v600
      %602 = vmatprep.mubr.f32.mxu0 %v411
      %603 = vmatmul.mubr.f32.gmra.mrb[0].mxu0 %v410
      %v604 = vpop.f32.mrb[0].mxu0
      %v605 = vadd.f32 0.0, %v604
      %v606 = vpop.f32.mrb[0].mxu0
      %v607 = vadd.f32 0.0, %v606
      %608 = vmatprep.mubr.f32.mxu0 %v413
      %609 = vmatmul.mubr.f32.gmra.mrb[0].mxu0 %v412
      %v610 = vpop.f32.mrb[0].mxu0
      %v611 = vadd.f32 0.0, %v610
      %v612 = vpop.f32.mrb[0].mxu0
      %v613 = vadd.f32 0.0, %v612
      %614 = vmatprep.mubr.f32.mxu0 %v415
      %615 = vmatmul.mubr.f32.gmra.mrb[0].mxu0 %v414
      %v616 = vpop.f32.mrb[0].mxu0
      %v617 = vadd.f32 0.0, %v616
      %v618 = vpop.f32.mrb[0].mxu0
      %v619 = vadd.f32 0.0, %v618
      %620 = vmatprep.mubr.f32.mxu0 %v417
      %621 = vmatmul.mubr.f32.gmra.mrb[0].mxu0 %v416
      %v622 = vpop.f32.mrb[0].mxu0
      %v623 = vadd.f32 0.0, %v622
      %v624 = vpop.f32.mrb[0].mxu0
      %v625 = vadd.f32 0.0, %v624
      %626 = vmatprep.mubr.f32.mxu0 %v419
      %627 = vmatmul.mubr.f32.gmra.mrb[0].mxu0 %v418
      %v628 = vpop.f32.mrb[0].mxu0
      %v629 = vadd.f32 0.0, %v628
      %v630 = vpop.f32.mrb[0].mxu0
      %v631 = vadd.f32 0.0, %v630
      %632 = vmatprep.mubr.f32.mxu0 %v421
      %633 = vmatmul.mubr.f32.gmra.mrb[0].mxu0 %v420
      %v634 = vpop.f32.mrb[0].mxu0
      %v635 = vadd.f32 0.0, %v634
      %v636 = vpop.f32.mrb[0].mxu0
      %v637 = vadd.f32 0.0, %v636
      %638 = vmatprep.mubr.f32.mxu0 %v423
      %639 = vmatmul.mubr.f32.gmra.mrb[0].mxu0 %v422
      %v640 = vpop.f32.mrb[0].mxu0
      %v641 = vadd.f32 0.0, %v640
      %v642 = vpop.f32.mrb[0].mxu0
      %v643 = vadd.f32 0.0, %v642
      %644 = vmatprep.mubr.f32.mxu0 %v425
      %645 = vmatmul.mubr.f32.gmra.mrb[0].mxu0 %v424
      %v646 = vpop.f32.mrb[0].mxu0
      %v647 = vadd.f32 0.0, %v646
      %v648 = vpop.f32.mrb[0].mxu0
      %v649 = vadd.f32 0.0, %v648
      %650 = vmatprep.mubr.f32.mxu0 %v427
      %651 = vmatmul.mubr.f32.gmra.mrb[0].mxu0 %v426
      %v652 = vpop.f32.mrb[0].mxu0
      %v653 = vadd.f32 0.0, %v652
      %v654 = vpop.f32.mrb[0].mxu0
      %v655 = vadd.f32 0.0, %v654
      %656 = vmatprep.mubr.f32.mxu0 %v429
      %657 = vmatmul.mubr.f32.gmra.mrb[0].mxu0 %v428
      %v658 = vpop.f32.mrb[0].mxu0
      %v659 = vadd.f32 0.0, %v658
      %v660 = vpop.f32.mrb[0].mxu0
      %v661 = vadd.f32 0.0, %v660
      %662 = vmatprep.mubr.f32.mxu0 %v431
      %663 = vmatmul.mubr.f32.gmra.mrb[0].mxu0 %v430
      %v664 = vpop.f32.mrb[0].mxu0
      %v665 = vadd.f32 0.0, %v664
      %v666 = vpop.f32.mrb[0].mxu0
      %v667 = vadd.f32 0.0, %v666
      %668 = vmatprep.mubr.f32.mxu0 %v433
      %669 = vmatmul.mubr.f32.gmra.mrb[0].mxu0 %v432
      %v670 = vpop.f32.mrb[0].mxu0
      %v671 = vadd.f32 0.0, %v670
      %v672 = vpop.f32.mrb[0].mxu0
      %v673 = vadd.f32 0.0, %v672
      %674 = vmatprep.mubr.f32.mxu0 %v435
      %675 = vmatmul.mubr.f32.gmra.mrb[0].mxu0 %v434
      %v676 = vpop.f32.mrb[0].mxu0
      %v677 = vadd.f32 0.0, %v676
      %v678 = vpop.f32.mrb[0].mxu0
      %v679 = vadd.f32 0.0, %v678
      %680 = vmatprep.mubr.f32.mxu0 %v437
      %681 = vmatmul.mubr.f32.gmra.mrb[0].mxu0 %v436
      %v682 = vpop.f32.mrb[0].mxu0
      %v683 = vadd.f32 0.0, %v682
      %v684 = vpop.f32.mrb[0].mxu0
      %v685 = vadd.f32 0.0, %v684
      %686 = vmatprep.mubr.f32.mxu0 %v439
      %687 = vmatmul.mubr.f32.gmra.mrb[0].mxu0 %v438
      %v688 = vpop.f32.mrb[0].mxu0
      %v689 = vadd.f32 0.0, %v688
      %v690 = vpop.f32.mrb[0].mxu0
      %v691 = vadd.f32 0.0, %v690
      %692 = vmatprep.mubr.f32.mxu0 %v441
      %693 = vmatmul.mubr.f32.gmra.mrb[0].mxu0 %v440
      %v694 = vpop.f32.mrb[0].mxu0
      %v695 = vadd.f32 0.0, %v694
      %v696 = vpop.f32.mrb[0].mxu0
      %v697 = vadd.f32 0.0, %v696
      %698 = vdwg.mxu0
      %vm699 = vcmask 556032
      %v700 = vsel %vm699, %v511, 0.0
      %v701 = vadd.f32 %v509, %v700
      %702 = vadd.xlane.f32.xlu0 %v701
      %v703 = vpop.xlane.xlu0 %702
      %v704 = vsel %vm699, %v517, 0.0
      %v705 = vadd.f32 %v515, %v704
      %706 = vadd.xlane.f32.xlu0 %v705
      %v707 = vpop.xlane.xlu0 %706
      %v708 = vsel %vm699, %v523, 0.0
      %v709 = vadd.f32 %v521, %v708
      %710 = vadd.xlane.f32.xlu0 %v709
      %v711 = vpop.xlane.xlu0 %710
      %v712 = vsel %vm699, %v529, 0.0
      %v713 = vadd.f32 %v527, %v712
      %714 = vadd.xlane.f32.xlu0 %v713
      %v715 = vpop.xlane.xlu0 %714
      %v716 = vsel %vm699, %v535, 0.0
      %v717 = vadd.f32 %v533, %v716
      %718 = vadd.xlane.f32.xlu0 %v717
      %v719 = vpop.xlane.xlu0 %718
      %v720 = vsel %vm699, %v541, 0.0
      %v721 = vadd.f32 %v539, %v720
      %722 = vadd.xlane.f32.xlu0 %v721
      %v723 = vpop.xlane.xlu0 %722
      %v724 = vsel %vm699, %v547, 0.0
      %v725 = vadd.f32 %v545, %v724
      %726 = vadd.xlane.f32.xlu0 %v725
      %v727 = vpop.xlane.xlu0 %726
      %v728 = vsel %vm699, %v553, 0.0
      %v729 = vadd.f32 %v551, %v728
      %730 = vadd.xlane.f32.xlu0 %v729
      %v731 = vpop.xlane.xlu0 %730
      %v732 = vsel %vm699, %v559, 0.0
      %v733 = vadd.f32 %v557, %v732
      %734 = vadd.xlane.f32.xlu0 %v733
      %v735 = vpop.xlane.xlu0 %734
      %v736 = vsel %vm699, %v565, 0.0
      %v737 = vadd.f32 %v563, %v736
      %738 = vadd.xlane.f32.xlu0 %v737
      %v739 = vpop.xlane.xlu0 %738
      %v740 = vsel %vm699, %v571, 0.0
      %v741 = vadd.f32 %v569, %v740
      %742 = vadd.xlane.f32.xlu0 %v741
      %v743 = vpop.xlane.xlu0 %742
      %v744 = vsel %vm699, %v577, 0.0
      %v745 = vadd.f32 %v575, %v744
      %746 = vadd.xlane.f32.xlu0 %v745
      %v747 = vpop.xlane.xlu0 %746
      %v748 = vsel %vm699, %v583, 0.0
      %v749 = vadd.f32 %v581, %v748
      %750 = vadd.xlane.f32.xlu0 %v749
      %v751 = vpop.xlane.xlu0 %750
      %v752 = vsel %vm699, %v589, 0.0
      %v753 = vadd.f32 %v587, %v752
      %754 = vadd.xlane.f32.xlu0 %v753
      %v755 = vpop.xlane.xlu0 %754
      %v756 = vsel %vm699, %v595, 0.0
      %v757 = vadd.f32 %v593, %v756
      %758 = vadd.xlane.f32.xlu0 %v757
      %v759 = vpop.xlane.xlu0 %758
      %v760 = vsel %vm699, %v601, 0.0
      %v761 = vadd.f32 %v599, %v760
      %762 = vadd.xlane.f32.xlu0 %v761
      %v763 = vpop.xlane.xlu0 %762
      %v764 = vsel %vm699, %v607, 0.0
      %v765 = vadd.f32 %v605, %v764
      %766 = vadd.xlane.f32.xlu0 %v765
      %v767 = vpop.xlane.xlu0 %766
      %v768 = vsel %vm699, %v613, 0.0
      %v769 = vadd.f32 %v611, %v768
      %770 = vadd.xlane.f32.xlu0 %v769
      %v771 = vpop.xlane.xlu0 %770
      %v772 = vsel %vm699, %v619, 0.0
      %v773 = vadd.f32 %v617, %v772
      %774 = vadd.xlane.f32.xlu0 %v773
      %v775 = vpop.xlane.xlu0 %774
      %v776 = vsel %vm699, %v625, 0.0
      %v777 = vadd.f32 %v623, %v776
      %778 = vadd.xlane.f32.xlu0 %v777
      %v779 = vpop.xlane.xlu0 %778
      %v780 = vsel %vm699, %v631, 0.0
      %v781 = vadd.f32 %v629, %v780
      %782 = vadd.xlane.f32.xlu0 %v781
      %v783 = vpop.xlane.xlu0 %782
      %v784 = vsel %vm699, %v637, 0.0
      %v785 = vadd.f32 %v635, %v784
      %786 = vadd.xlane.f32.xlu0 %v785
      %v787 = vpop.xlane.xlu0 %786
      %v788 = vsel %vm699, %v643, 0.0
      %v789 = vadd.f32 %v641, %v788
      %790 = vadd.xlane.f32.xlu0 %v789
      %v791 = vpop.xlane.xlu0 %790
      %v792 = vsel %vm699, %v649, 0.0
      %v793 = vadd.f32 %v647, %v792
      %794 = vadd.xlane.f32.xlu0 %v793
      %v795 = vpop.xlane.xlu0 %794
      %v796 = vsel %vm699, %v655, 0.0
      %v797 = vadd.f32 %v653, %v796
      %798 = vadd.xlane.f32.xlu0 %v797
      %v799 = vpop.xlane.xlu0 %798
      %v800 = vsel %vm699, %v661, 0.0
      %v801 = vadd.f32 %v659, %v800
      %802 = vadd.xlane.f32.xlu0 %v801
      %v803 = vpop.xlane.xlu0 %802
      %v804 = vsel %vm699, %v667, 0.0
      %v805 = vadd.f32 %v665, %v804
      %806 = vadd.xlane.f32.xlu0 %v805
      %v807 = vpop.xlane.xlu0 %806
      %v808 = vsel %vm699, %v673, 0.0
      %v809 = vadd.f32 %v671, %v808
      %810 = vadd.xlane.f32.xlu0 %v809
      %v811 = vpop.xlane.xlu0 %810
      %v812 = vsel %vm699, %v679, 0.0
      %v813 = vadd.f32 %v677, %v812
      %814 = vadd.xlane.f32.xlu0 %v813
      %v815 = vpop.xlane.xlu0 %814
      %v816 = vsel %vm699, %v685, 0.0
      %v817 = vadd.f32 %v683, %v816
      %818 = vadd.xlane.f32.xlu0 %v817
      %v819 = vpop.xlane.xlu0 %818
      %v820 = vsel %vm699, %v691, 0.0
      %v821 = vadd.f32 %v689, %v820
      %822 = vadd.xlane.f32.xlu0 %v821
      %v823 = vpop.xlane.xlu0 %822
      %v824 = vsel %vm699, %v697, 0.0
      %v825 = vadd.f32 %v695, %v824
      %826 = vadd.xlane.f32.xlu0 %v825
      %v827 = vpop.xlane.xlu0 %826
      %v828 = vmul.f32 %v509, %v509
      %v829 = vmul.f32 %v511, %v511
      %v830 = vmul.f32 %v515, %v515
      %v831 = vmul.f32 %v517, %v517
      %v832 = vmul.f32 %v521, %v521
      %v833 = vmul.f32 %v523, %v523
      %v834 = vmul.f32 %v527, %v527
      %v835 = vmul.f32 %v529, %v529
      %v836 = vmul.f32 %v533, %v533
      %v837 = vmul.f32 %v535, %v535
      %v838 = vmul.f32 %v539, %v539
      %v839 = vmul.f32 %v541, %v541
      %v840 = vmul.f32 %v545, %v545
      %v841 = vmul.f32 %v547, %v547
      %v842 = vmul.f32 %v551, %v551
      %v843 = vmul.f32 %v553, %v553
      %v844 = vmul.f32 %v557, %v557
      %v845 = vmul.f32 %v559, %v559
      %v846 = vmul.f32 %v563, %v563
      %v847 = vmul.f32 %v565, %v565
      %v848 = vmul.f32 %v569, %v569
      %v849 = vmul.f32 %v571, %v571
      %v850 = vmul.f32 %v575, %v575
      %v851 = vmul.f32 %v577, %v577
      %v852 = vmul.f32 %v581, %v581
      %v853 = vmul.f32 %v583, %v583
      %v854 = vmul.f32 %v587, %v587
      %v855 = vmul.f32 %v589, %v589
      %v856 = vmul.f32 %v593, %v593
      %v857 = vmul.f32 %v595, %v595
      %v858 = vmul.f32 %v599, %v599
      %v859 = vmul.f32 %v601, %v601
      %v860 = vmul.f32 %v605, %v605
      %v861 = vmul.f32 %v607, %v607
      %v862 = vmul.f32 %v611, %v611
      %v863 = vmul.f32 %v613, %v613
      %v864 = vmul.f32 %v617, %v617
      %v865 = vmul.f32 %v619, %v619
      %v866 = vmul.f32 %v623, %v623
      %v867 = vmul.f32 %v625, %v625
      %v868 = vmul.f32 %v629, %v629
      %v869 = vmul.f32 %v631, %v631
      %v870 = vmul.f32 %v635, %v635
      %v871 = vmul.f32 %v637, %v637
      %v872 = vmul.f32 %v641, %v641
      %v873 = vmul.f32 %v643, %v643
      %v874 = vmul.f32 %v647, %v647
      %v875 = vmul.f32 %v649, %v649
      %v876 = vmul.f32 %v653, %v653
      %v877 = vmul.f32 %v655, %v655
      %v878 = vmul.f32 %v659, %v659
      %v879 = vmul.f32 %v661, %v661
      %v880 = vmul.f32 %v665, %v665
      %v881 = vmul.f32 %v667, %v667
      %v882 = vmul.f32 %v671, %v671
      %v883 = vmul.f32 %v673, %v673
      %v884 = vmul.f32 %v677, %v677
      %v885 = vmul.f32 %v679, %v679
      %v886 = vmul.f32 %v683, %v683
      %v887 = vmul.f32 %v685, %v685
      %v888 = vmul.f32 %v689, %v689
      %v889 = vmul.f32 %v691, %v691
      %v890 = vmul.f32 %v695, %v695
      %v891 = vmul.f32 %v697, %v697
      %v892 = vsel %vm699, %v829, 0.0
      %v893 = vadd.f32 %v828, %v892
      %894 = vadd.xlane.f32.xlu0 %v893
      %v895 = vpop.xlane.xlu0 %894
      %v896 = vsel %vm699, %v831, 0.0
      %v897 = vadd.f32 %v830, %v896
      %898 = vadd.xlane.f32.xlu0 %v897
      %v899 = vpop.xlane.xlu0 %898
      %v900 = vsel %vm699, %v833, 0.0
      %v901 = vadd.f32 %v832, %v900
      %902 = vadd.xlane.f32.xlu0 %v901
      %v903 = vpop.xlane.xlu0 %902
      %v904 = vsel %vm699, %v835, 0.0
      %v905 = vadd.f32 %v834, %v904
      %906 = vadd.xlane.f32.xlu0 %v905
      %v907 = vpop.xlane.xlu0 %906
      %v908 = vsel %vm699, %v837, 0.0
      %v909 = vadd.f32 %v836, %v908
      %910 = vadd.xlane.f32.xlu0 %v909
      %v911 = vpop.xlane.xlu0 %910
      %v912 = vsel %vm699, %v839, 0.0
      %v913 = vadd.f32 %v838, %v912
      %914 = vadd.xlane.f32.xlu0 %v913
      %v915 = vpop.xlane.xlu0 %914
      %v916 = vsel %vm699, %v841, 0.0
      %v917 = vadd.f32 %v840, %v916
      %918 = vadd.xlane.f32.xlu0 %v917
      %v919 = vpop.xlane.xlu0 %918
      %v920 = vsel %vm699, %v843, 0.0
      %v921 = vadd.f32 %v842, %v920
      %922 = vadd.xlane.f32.xlu0 %v921
      %v923 = vpop.xlane.xlu0 %922
      %v924 = vsel %vm699, %v845, 0.0
      %v925 = vadd.f32 %v844, %v924
      %926 = vadd.xlane.f32.xlu0 %v925
      %v927 = vpop.xlane.xlu0 %926
      %v928 = vsel %vm699, %v847, 0.0
      %v929 = vadd.f32 %v846, %v928
      %930 = vadd.xlane.f32.xlu0 %v929
      %v931 = vpop.xlane.xlu0 %930
      %v932 = vsel %vm699, %v849, 0.0
      %v933 = vadd.f32 %v848, %v932
      %934 = vadd.xlane.f32.xlu0 %v933
      %v935 = vpop.xlane.xlu0 %934
      %v936 = vsel %vm699, %v851, 0.0
      %v937 = vadd.f32 %v850, %v936
      %938 = vadd.xlane.f32.xlu0 %v937
      %v939 = vpop.xlane.xlu0 %938
      %v940 = vsel %vm699, %v853, 0.0
      %v941 = vadd.f32 %v852, %v940
      %942 = vadd.xlane.f32.xlu0 %v941
      %v943 = vpop.xlane.xlu0 %942
      %v944 = vsel %vm699, %v855, 0.0
      %v945 = vadd.f32 %v854, %v944
      %946 = vadd.xlane.f32.xlu0 %v945
      %v947 = vpop.xlane.xlu0 %946
      %v948 = vsel %vm699, %v857, 0.0
      %v949 = vadd.f32 %v856, %v948
      %950 = vadd.xlane.f32.xlu0 %v949
      %v951 = vpop.xlane.xlu0 %950
      %v952 = vsel %vm699, %v859, 0.0
      %v953 = vadd.f32 %v858, %v952
      %954 = vadd.xlane.f32.xlu0 %v953
      %v955 = vpop.xlane.xlu0 %954
      %v956 = vsel %vm699, %v861, 0.0
      %v957 = vadd.f32 %v860, %v956
      %958 = vadd.xlane.f32.xlu0 %v957
      %v959 = vpop.xlane.xlu0 %958
      %v960 = vsel %vm699, %v863, 0.0
      %v961 = vadd.f32 %v862, %v960
      %962 = vadd.xlane.f32.xlu0 %v961
      %v963 = vpop.xlane.xlu0 %962
      %v964 = vsel %vm699, %v865, 0.0
      %v965 = vadd.f32 %v864, %v964
      %966 = vadd.xlane.f32.xlu0 %v965
      %v967 = vpop.xlane.xlu0 %966
      %v968 = vsel %vm699, %v867, 0.0
      %v969 = vadd.f32 %v866, %v968
      %970 = vadd.xlane.f32.xlu0 %v969
      %v971 = vpop.xlane.xlu0 %970
      %v972 = vsel %vm699, %v869, 0.0
      %v973 = vadd.f32 %v868, %v972
      %974 = vadd.xlane.f32.xlu0 %v973
      %v975 = vpop.xlane.xlu0 %974
      %v976 = vsel %vm699, %v871, 0.0
      %v977 = vadd.f32 %v870, %v976
      %978 = vadd.xlane.f32.xlu0 %v977
      %v979 = vpop.xlane.xlu0 %978
      %v980 = vsel %vm699, %v873, 0.0
      %v981 = vadd.f32 %v872, %v980
      %982 = vadd.xlane.f32.xlu0 %v981
      %v983 = vpop.xlane.xlu0 %982
      %v984 = vsel %vm699, %v875, 0.0
      %v985 = vadd.f32 %v874, %v984
      %986 = vadd.xlane.f32.xlu0 %v985
      %v987 = vpop.xlane.xlu0 %986
      %v988 = vsel %vm699, %v877, 0.0
      %v989 = vadd.f32 %v876, %v988
      %990 = vadd.xlane.f32.xlu0 %v989
      %v991 = vpop.xlane.xlu0 %990
      %v992 = vsel %vm699, %v879, 0.0
      %v993 = vadd.f32 %v878, %v992
      %994 = vadd.xlane.f32.xlu0 %v993
      %v995 = vpop.xlane.xlu0 %994
      %v996 = vsel %vm699, %v881, 0.0
      %v997 = vadd.f32 %v880, %v996
      %998 = vadd.xlane.f32.xlu0 %v997
      %v999 = vpop.xlane.xlu0 %998
      %v1000 = vsel %vm699, %v883, 0.0
      %v1001 = vadd.f32 %v882, %v1000
      %1002 = vadd.xlane.f32.xlu0 %v1001
      %v1003 = vpop.xlane.xlu0 %1002
      %v1004 = vsel %vm699, %v885, 0.0
      %v1005 = vadd.f32 %v884, %v1004
      %1006 = vadd.xlane.f32.xlu0 %v1005
      %v1007 = vpop.xlane.xlu0 %1006
      %v1008 = vsel %vm699, %v887, 0.0
      %v1009 = vadd.f32 %v886, %v1008
      %1010 = vadd.xlane.f32.xlu0 %v1009
      %v1011 = vpop.xlane.xlu0 %1010
      %v1012 = vsel %vm699, %v889, 0.0
      %v1013 = vadd.f32 %v888, %v1012
      %1014 = vadd.xlane.f32.xlu0 %v1013
      %v1015 = vpop.xlane.xlu0 %1014
      %v1016 = vsel %vm699, %v891, 0.0
      %v1017 = vadd.f32 %v890, %v1016
      %1018 = vadd.xlane.f32.xlu0 %v1017
      %v1019 = vpop.xlane.xlu0 %1018
      %v1020 = vmul.f32 %v703, 0.0051020407
      %v1021 = vmul.f32 %v707, 0.0051020407
      %v1022 = vmul.f32 %v711, 0.0051020407
      %v1023 = vmul.f32 %v715, 0.0051020407
      %v1024 = vmul.f32 %v719, 0.0051020407
      %v1025 = vmul.f32 %v723, 0.0051020407
      %v1026 = vmul.f32 %v727, 0.0051020407
      %v1027 = vmul.f32 %v731, 0.0051020407
      %v1028 = vmul.f32 %v735, 0.0051020407
      %v1029 = vmul.f32 %v739, 0.0051020407
      %v1030 = vmul.f32 %v743, 0.0051020407
      %v1031 = vmul.f32 %v747, 0.0051020407
      %v1032 = vmul.f32 %v751, 0.0051020407
      %v1033 = vmul.f32 %v755, 0.0051020407
      %v1034 = vmul.f32 %v759, 0.0051020407
      %v1035 = vmul.f32 %v763, 0.0051020407
      %v1036 = vmul.f32 %v767, 0.0051020407
      %v1037 = vmul.f32 %v771, 0.0051020407
      %v1038 = vmul.f32 %v775, 0.0051020407
      %v1039 = vmul.f32 %v779, 0.0051020407
      %v1040 = vmul.f32 %v783, 0.0051020407
      %v1041 = vmul.f32 %v787, 0.0051020407
      %v1042 = vmul.f32 %v791, 0.0051020407
      %v1043 = vmul.f32 %v795, 0.0051020407
      %v1044 = vmul.f32 %v799, 0.0051020407
      %v1045 = vmul.f32 %v803, 0.0051020407
      %v1046 = vmul.f32 %v807, 0.0051020407
      %v1047 = vmul.f32 %v811, 0.0051020407
      %v1048 = vmul.f32 %v815, 0.0051020407
      %v1049 = vmul.f32 %v819, 0.0051020407
      %v1050 = vmul.f32 %v823, 0.0051020407
      %v1051 = vmul.f32 %v827, 0.0051020407
      %v1052 = vmul.f32 %v895, 0.0051020407
      %v1053 = vmul.f32 %v899, 0.0051020407
      %v1054 = vmul.f32 %v903, 0.0051020407
      %v1055 = vmul.f32 %v907, 0.0051020407
      %v1056 = vmul.f32 %v911, 0.0051020407
      %v1057 = vmul.f32 %v915, 0.0051020407
      %v1058 = vmul.f32 %v919, 0.0051020407
      %v1059 = vmul.f32 %v923, 0.0051020407
      %v1060 = vmul.f32 %v927, 0.0051020407
      %v1061 = vmul.f32 %v931, 0.0051020407
      %v1062 = vmul.f32 %v935, 0.0051020407
      %v1063 = vmul.f32 %v939, 0.0051020407
      %v1064 = vmul.f32 %v943, 0.0051020407
      %v1065 = vmul.f32 %v947, 0.0051020407
      %v1066 = vmul.f32 %v951, 0.0051020407
      %v1067 = vmul.f32 %v955, 0.0051020407
      %v1068 = vmul.f32 %v959, 0.0051020407
      %v1069 = vmul.f32 %v963, 0.0051020407
      %v1070 = vmul.f32 %v967, 0.0051020407
      %v1071 = vmul.f32 %v971, 0.0051020407
      %v1072 = vmul.f32 %v975, 0.0051020407
      %v1073 = vmul.f32 %v979, 0.0051020407
      %v1074 = vmul.f32 %v983, 0.0051020407
      %v1075 = vmul.f32 %v987, 0.0051020407
      %v1076 = vmul.f32 %v991, 0.0051020407
      %v1077 = vmul.f32 %v995, 0.0051020407
      %v1078 = vmul.f32 %v999, 0.0051020407
      %v1079 = vmul.f32 %v1003, 0.0051020407
      %v1080 = vmul.f32 %v1007, 0.0051020407
      %v1081 = vmul.f32 %v1011, 0.0051020407
      %v1082 = vmul.f32 %v1015, 0.0051020407
      %v1083 = vmul.f32 %v1019, 0.0051020407
      %v1084 = vmul.f32 %v1020, %v1020
      %v1085 = vmul.f32 %v1021, %v1021
      %v1086 = vmul.f32 %v1022, %v1022
      %v1087 = vmul.f32 %v1023, %v1023
      %v1088 = vmul.f32 %v1024, %v1024
      %v1089 = vmul.f32 %v1025, %v1025
      %v1090 = vmul.f32 %v1026, %v1026
      %v1091 = vmul.f32 %v1027, %v1027
      %v1092 = vmul.f32 %v1028, %v1028
      %v1093 = vmul.f32 %v1029, %v1029
      %v1094 = vmul.f32 %v1030, %v1030
      %v1095 = vmul.f32 %v1031, %v1031
      %v1096 = vmul.f32 %v1032, %v1032
      %v1097 = vmul.f32 %v1033, %v1033
      %v1098 = vmul.f32 %v1034, %v1034
      %v1099 = vmul.f32 %v1035, %v1035
      %v1100 = vmul.f32 %v1036, %v1036
      %v1101 = vmul.f32 %v1037, %v1037
      %v1102 = vmul.f32 %v1038, %v1038
      %v1103 = vmul.f32 %v1039, %v1039
      %v1104 = vmul.f32 %v1040, %v1040
      %v1105 = vmul.f32 %v1041, %v1041
      %v1106 = vmul.f32 %v1042, %v1042
      %v1107 = vmul.f32 %v1043, %v1043
      %v1108 = vmul.f32 %v1044, %v1044
      %v1109 = vmul.f32 %v1045, %v1045
      %v1110 = vmul.f32 %v1046, %v1046
      %v1111 = vmul.f32 %v1047, %v1047
      %v1112 = vmul.f32 %v1048, %v1048
      %v1113 = vmul.f32 %v1049, %v1049
      %v1114 = vmul.f32 %v1050, %v1050
      %v1115 = vmul.f32 %v1051, %v1051
      %v1116 = vsub.f32 %v1052, %v1084
      %v1117 = vsub.f32 %v1053, %v1085
      %v1118 = vsub.f32 %v1054, %v1086
      %v1119 = vsub.f32 %v1055, %v1087
      %v1120 = vsub.f32 %v1056, %v1088
      %v1121 = vsub.f32 %v1057, %v1089
      %v1122 = vsub.f32 %v1058, %v1090
      %v1123 = vsub.f32 %v1059, %v1091
      %v1124 = vsub.f32 %v1060, %v1092
      %v1125 = vsub.f32 %v1061, %v1093
      %v1126 = vsub.f32 %v1062, %v1094
      %v1127 = vsub.f32 %v1063, %v1095
      %v1128 = vsub.f32 %v1064, %v1096
      %v1129 = vsub.f32 %v1065, %v1097
      %v1130 = vsub.f32 %v1066, %v1098
      %v1131 = vsub.f32 %v1067, %v1099
      %v1132 = vsub.f32 %v1068, %v1100
      %v1133 = vsub.f32 %v1069, %v1101
      %v1134 = vsub.f32 %v1070, %v1102
      %v1135 = vsub.f32 %v1071, %v1103
      %v1136 = vsub.f32 %v1072, %v1104
      %v1137 = vsub.f32 %v1073, %v1105
      %v1138 = vsub.f32 %v1074, %v1106
      %v1139 = vsub.f32 %v1075, %v1107
      %v1140 = vsub.f32 %v1076, %v1108
      %v1141 = vsub.f32 %v1077, %v1109
      %v1142 = vsub.f32 %v1078, %v1110
      %v1143 = vsub.f32 %v1079, %v1111
      %v1144 = vsub.f32 %v1080, %v1112
      %v1145 = vsub.f32 %v1081, %v1113
      %v1146 = vsub.f32 %v1082, %v1114
      %v1147 = vsub.f32 %v1083, %v1115
      %v1148 = vmax.f32 %v1116, 0.0
      %v1149 = vmax.f32 %v1117, 0.0
      %v1150 = vmax.f32 %v1118, 0.0
      %v1151 = vmax.f32 %v1119, 0.0
      %v1152 = vmax.f32 %v1120, 0.0
      %v1153 = vmax.f32 %v1121, 0.0
      %v1154 = vmax.f32 %v1122, 0.0
      %v1155 = vmax.f32 %v1123, 0.0
      %v1156 = vmax.f32 %v1124, 0.0
      %v1157 = vmax.f32 %v1125, 0.0
      %v1158 = vmax.f32 %v1126, 0.0
      %v1159 = vmax.f32 %v1127, 0.0
      %v1160 = vmax.f32 %v1128, 0.0
      %v1161 = vmax.f32 %v1129, 0.0
      %v1162 = vmax.f32 %v1130, 0.0
      %v1163 = vmax.f32 %v1131, 0.0
      %v1164 = vmax.f32 %v1132, 0.0
      %v1165 = vmax.f32 %v1133, 0.0
      %v1166 = vmax.f32 %v1134, 0.0
      %v1167 = vmax.f32 %v1135, 0.0
      %v1168 = vmax.f32 %v1136, 0.0
      %v1169 = vmax.f32 %v1137, 0.0
      %v1170 = vmax.f32 %v1138, 0.0
      %v1171 = vmax.f32 %v1139, 0.0
      %v1172 = vmax.f32 %v1140, 0.0
      %v1173 = vmax.f32 %v1141, 0.0
      %v1174 = vmax.f32 %v1142, 0.0
      %v1175 = vmax.f32 %v1143, 0.0
      %v1176 = vmax.f32 %v1144, 0.0
      %v1177 = vmax.f32 %v1145, 0.0
      %v1178 = vmax.f32 %v1146, 0.0
      %v1179 = vmax.f32 %v1147, 0.0
      %v1180 = vld [vmem:[%s235] sm:$0xff]
      %v1181 = vld [vmem:[%s235 + $0x8] sm:$0xff]
      %v1182 = vld [vmem:[%s235 + $0x10] sm:$0xff]
      %v1183 = vld [vmem:[%s235 + $0x18] sm:$0xff]
      %v1184 = vld [vmem:[%s235 + $0x20] sm:$0xff]
      %v1185 = vld [vmem:[%s235 + $0x28] sm:$0xff]
      %v1186 = vld [vmem:[%s235 + $0x30] sm:$0xff]
      %v1187 = vld [vmem:[%s235 + $0x38] sm:$0xff]
      %v1188 = vld [vmem:[%s235 + $0x40] sm:$0xff]
      %v1189 = vld [vmem:[%s235 + $0x48] sm:$0xff]
      %v1190 = vld [vmem:[%s235 + $0x50] sm:$0xff]
      %v1191 = vld [vmem:[%s235 + $0x58] sm:$0xff]
      %v1192 = vld [vmem:[%s235 + $0x60] sm:$0xff]
      %v1193 = vld [vmem:[%s235 + $0x68] sm:$0xff]
      %v1194 = vld [vmem:[%s235 + $0x70] sm:$0xff]
      %v1195 = vld [vmem:[%s235 + $0x78] sm:$0xff]
      %v1196 = vld [vmem:[%s235 + $0x80] sm:$0xff]
      %v1197 = vld [vmem:[%s235 + $0x88] sm:$0xff]
      %v1198 = vld [vmem:[%s235 + $0x90] sm:$0xff]
      %v1199 = vld [vmem:[%s235 + $0x98] sm:$0xff]
      %v1200 = vld [vmem:[%s235 + $0xa0] sm:$0xff]
      %v1201 = vld [vmem:[%s235 + $0xa8] sm:$0xff]
      %v1202 = vld [vmem:[%s235 + $0xb0] sm:$0xff]
      %v1203 = vld [vmem:[%s235 + $0xb8] sm:$0xff]
      %v1204 = vld [vmem:[%s235 + $0xc0] sm:$0xff]
      %v1205 = vld [vmem:[%s235 + $0xc8] sm:$0xff]
      %v1206 = vld [vmem:[%s235 + $0xd0] sm:$0xff]
      %v1207 = vld [vmem:[%s235 + $0xd8] sm:$0xff]
      %v1208 = vld [vmem:[%s235 + $0xe0] sm:$0xff]
      %v1209 = vld [vmem:[%s235 + $0xe8] sm:$0xff]
      %v1210 = vld [vmem:[%s235 + $0xf0] sm:$0xff]
      %v1211 = vld [vmem:[%s235 + $0xf8] sm:$0xff]
      %v1212 = vadd.f32 %v1148, 1e-05
      %v1213 = vadd.f32 %v1149, 1e-05
      %v1214 = vadd.f32 %v1150, 1e-05
      %v1215 = vadd.f32 %v1151, 1e-05
      %v1216 = vadd.f32 %v1152, 1e-05
      %v1217 = vadd.f32 %v1153, 1e-05
      %v1218 = vadd.f32 %v1154, 1e-05
      %v1219 = vadd.f32 %v1155, 1e-05
      %v1220 = vadd.f32 %v1156, 1e-05
      %v1221 = vadd.f32 %v1157, 1e-05
      %v1222 = vadd.f32 %v1158, 1e-05
      %v1223 = vadd.f32 %v1159, 1e-05
      %v1224 = vadd.f32 %v1160, 1e-05
      %v1225 = vadd.f32 %v1161, 1e-05
      %v1226 = vadd.f32 %v1162, 1e-05
      %v1227 = vadd.f32 %v1163, 1e-05
      %v1228 = vadd.f32 %v1164, 1e-05
      %v1229 = vadd.f32 %v1165, 1e-05
      %v1230 = vadd.f32 %v1166, 1e-05
      %v1231 = vadd.f32 %v1167, 1e-05
      %v1232 = vadd.f32 %v1168, 1e-05
      %v1233 = vadd.f32 %v1169, 1e-05
      %v1234 = vadd.f32 %v1170, 1e-05
      %v1235 = vadd.f32 %v1171, 1e-05
      %v1236 = vadd.f32 %v1172, 1e-05
      %v1237 = vadd.f32 %v1173, 1e-05
      %v1238 = vadd.f32 %v1174, 1e-05
      %v1239 = vadd.f32 %v1175, 1e-05
      %v1240 = vadd.f32 %v1176, 1e-05
      %v1241 = vadd.f32 %v1177, 1e-05
      %v1242 = vadd.f32 %v1178, 1e-05
      %v1243 = vadd.f32 %v1179, 1e-05
      %v1244 = vrsqrt.pop %v1212
      %v1245 = vrsqrt.pop %v1213
      %v1246 = vrsqrt.pop %v1214
      %v1247 = vrsqrt.pop %v1215
      %v1248 = vrsqrt.pop %v1216
      %v1249 = vrsqrt.pop %v1217
      %v1250 = vrsqrt.pop %v1218
      %v1251 = vrsqrt.pop %v1219
      %v1252 = vrsqrt.pop %v1220
      %v1253 = vrsqrt.pop %v1221
      %v1254 = vrsqrt.pop %v1222
      %v1255 = vrsqrt.pop %v1223
      %v1256 = vrsqrt.pop %v1224
      %v1257 = vrsqrt.pop %v1225
      %v1258 = vrsqrt.pop %v1226
      %v1259 = vrsqrt.pop %v1227
      %v1260 = vrsqrt.pop %v1228
      %v1261 = vrsqrt.pop %v1229
      %v1262 = vrsqrt.pop %v1230
      %v1263 = vrsqrt.pop %v1231
      %v1264 = vrsqrt.pop %v1232
      %v1265 = vrsqrt.pop %v1233
      %v1266 = vrsqrt.pop %v1234
      %v1267 = vrsqrt.pop %v1235
      %v1268 = vrsqrt.pop %v1236
      %v1269 = vrsqrt.pop %v1237
      %v1270 = vrsqrt.pop %v1238
      %v1271 = vrsqrt.pop %v1239
      %v1272 = vrsqrt.pop %v1240
      %v1273 = vrsqrt.pop %v1241
      %v1274 = vrsqrt.pop %v1242
      %v1275 = vrsqrt.pop %v1243
      %v1276 = vmul.f32 %v1180, %v1244
      %v1277 = vmul.f32 %v1181, %v1245
      %v1278 = vmul.f32 %v1182, %v1246
      %v1279 = vmul.f32 %v1183, %v1247
      %v1280 = vmul.f32 %v1184, %v1248
      %v1281 = vmul.f32 %v1185, %v1249
      %v1282 = vmul.f32 %v1186, %v1250
      %v1283 = vmul.f32 %v1187, %v1251
      %v1284 = vmul.f32 %v1188, %v1252
      %v1285 = vmul.f32 %v1189, %v1253
      %v1286 = vmul.f32 %v1190, %v1254
      %v1287 = vmul.f32 %v1191, %v1255
      %v1288 = vmul.f32 %v1192, %v1256
      %v1289 = vmul.f32 %v1193, %v1257
      %v1290 = vmul.f32 %v1194, %v1258
      %v1291 = vmul.f32 %v1195, %v1259
      %v1292 = vmul.f32 %v1196, %v1260
      %v1293 = vmul.f32 %v1197, %v1261
      %v1294 = vmul.f32 %v1198, %v1262
      %v1295 = vmul.f32 %v1199, %v1263
      %v1296 = vmul.f32 %v1200, %v1264
      %v1297 = vmul.f32 %v1201, %v1265
      %v1298 = vmul.f32 %v1202, %v1266
      %v1299 = vmul.f32 %v1203, %v1267
      %v1300 = vmul.f32 %v1204, %v1268
      %v1301 = vmul.f32 %v1205, %v1269
      %v1302 = vmul.f32 %v1206, %v1270
      %v1303 = vmul.f32 %v1207, %v1271
      %v1304 = vmul.f32 %v1208, %v1272
      %v1305 = vmul.f32 %v1209, %v1273
      %v1306 = vmul.f32 %v1210, %v1274
      %v1307 = vmul.f32 %v1211, %v1275
      %v1308 = vld [vmem:[%s241] sm:$0xff]
      %v1309 = vld [vmem:[%s241 + $0x8] sm:$0xff]
      %v1310 = vld [vmem:[%s241 + $0x10] sm:$0xff]
      %v1311 = vld [vmem:[%s241 + $0x18] sm:$0xff]
      %v1312 = vld [vmem:[%s241 + $0x20] sm:$0xff]
      %v1313 = vld [vmem:[%s241 + $0x28] sm:$0xff]
      %v1314 = vld [vmem:[%s241 + $0x30] sm:$0xff]
      %v1315 = vld [vmem:[%s241 + $0x38] sm:$0xff]
      %v1316 = vld [vmem:[%s241 + $0x40] sm:$0xff]
      %v1317 = vld [vmem:[%s241 + $0x48] sm:$0xff]
      %v1318 = vld [vmem:[%s241 + $0x50] sm:$0xff]
      %v1319 = vld [vmem:[%s241 + $0x58] sm:$0xff]
      %v1320 = vld [vmem:[%s241 + $0x60] sm:$0xff]
      %v1321 = vld [vmem:[%s241 + $0x68] sm:$0xff]
      %v1322 = vld [vmem:[%s241 + $0x70] sm:$0xff]
      %v1323 = vld [vmem:[%s241 + $0x78] sm:$0xff]
      %v1324 = vld [vmem:[%s241 + $0x80] sm:$0xff]
      %v1325 = vld [vmem:[%s241 + $0x88] sm:$0xff]
      %v1326 = vld [vmem:[%s241 + $0x90] sm:$0xff]
      %v1327 = vld [vmem:[%s241 + $0x98] sm:$0xff]
      %v1328 = vld [vmem:[%s241 + $0xa0] sm:$0xff]
      %v1329 = vld [vmem:[%s241 + $0xa8] sm:$0xff]
      %v1330 = vld [vmem:[%s241 + $0xb0] sm:$0xff]
      %v1331 = vld [vmem:[%s241 + $0xb8] sm:$0xff]
      %v1332 = vld [vmem:[%s241 + $0xc0] sm:$0xff]
      %v1333 = vld [vmem:[%s241 + $0xc8] sm:$0xff]
      %v1334 = vld [vmem:[%s241 + $0xd0] sm:$0xff]
      %v1335 = vld [vmem:[%s241 + $0xd8] sm:$0xff]
      %v1336 = vld [vmem:[%s241 + $0xe0] sm:$0xff]
      %v1337 = vld [vmem:[%s241 + $0xe8] sm:$0xff]
      %v1338 = vld [vmem:[%s241 + $0xf0] sm:$0xff]
      %v1339 = vld [vmem:[%s241 + $0xf8] sm:$0xff]
      %v1340 = vmul.f32 %v1020, %v1276
      %v1341 = vmul.f32 %v1021, %v1277
      %v1342 = vmul.f32 %v1022, %v1278
      %v1343 = vmul.f32 %v1023, %v1279
      %v1344 = vmul.f32 %v1024, %v1280
      %v1345 = vmul.f32 %v1025, %v1281
      %v1346 = vmul.f32 %v1026, %v1282
      %v1347 = vmul.f32 %v1027, %v1283
      %v1348 = vmul.f32 %v1028, %v1284
      %v1349 = vmul.f32 %v1029, %v1285
      %v1350 = vmul.f32 %v1030, %v1286
      %v1351 = vmul.f32 %v1031, %v1287
      %v1352 = vmul.f32 %v1032, %v1288
      %v1353 = vmul.f32 %v1033, %v1289
      %v1354 = vmul.f32 %v1034, %v1290
      %v1355 = vmul.f32 %v1035, %v1291
      %v1356 = vmul.f32 %v1036, %v1292
      %v1357 = vmul.f32 %v1037, %v1293
      %v1358 = vmul.f32 %v1038, %v1294
      %v1359 = vmul.f32 %v1039, %v1295
      %v1360 = vmul.f32 %v1040, %v1296
      %v1361 = vmul.f32 %v1041, %v1297
      %v1362 = vmul.f32 %v1042, %v1298
      %v1363 = vmul.f32 %v1043, %v1299
      %v1364 = vmul.f32 %v1044, %v1300
      %v1365 = vmul.f32 %v1045, %v1301
      %v1366 = vmul.f32 %v1046, %v1302
      %v1367 = vmul.f32 %v1047, %v1303
      %v1368 = vmul.f32 %v1048, %v1304
      %v1369 = vmul.f32 %v1049, %v1305
      %v1370 = vmul.f32 %v1050, %v1306
      %v1371 = vmul.f32 %v1051, %v1307
      %v1372 = vsub.f32 %v1308, %v1340
      %v1373 = vsub.f32 %v1309, %v1341
      %v1374 = vsub.f32 %v1310, %v1342
      %v1375 = vsub.f32 %v1311, %v1343
      %v1376 = vsub.f32 %v1312, %v1344
      %v1377 = vsub.f32 %v1313, %v1345
      %v1378 = vsub.f32 %v1314, %v1346
      %v1379 = vsub.f32 %v1315, %v1347
      %v1380 = vsub.f32 %v1316, %v1348
      %v1381 = vsub.f32 %v1317, %v1349
      %v1382 = vsub.f32 %v1318, %v1350
      %v1383 = vsub.f32 %v1319, %v1351
      %v1384 = vsub.f32 %v1320, %v1352
      %v1385 = vsub.f32 %v1321, %v1353
      %v1386 = vsub.f32 %v1322, %v1354
      %v1387 = vsub.f32 %v1323, %v1355
      %v1388 = vsub.f32 %v1324, %v1356
      %v1389 = vsub.f32 %v1325, %v1357
      %v1390 = vsub.f32 %v1326, %v1358
      %v1391 = vsub.f32 %v1327, %v1359
      %v1392 = vsub.f32 %v1328, %v1360
      %v1393 = vsub.f32 %v1329, %v1361
      %v1394 = vsub.f32 %v1330, %v1362
      %v1395 = vsub.f32 %v1331, %v1363
      %v1396 = vsub.f32 %v1332, %v1364
      %v1397 = vsub.f32 %v1333, %v1365
      %v1398 = vsub.f32 %v1334, %v1366
      %v1399 = vsub.f32 %v1335, %v1367
      %v1400 = vsub.f32 %v1336, %v1368
      %v1401 = vsub.f32 %v1337, %v1369
      %v1402 = vsub.f32 %v1338, %v1370
      %v1403 = vsub.f32 %v1339, %v1371
      %1405 = vset.pattern.permute.xlu0 0
      %1406 = vperm.xlu0 %1405, %v1276
      %v1407 = vpop.permute.xlu0 %1406
      %1410 = vset.pattern.permute.xlu0 0
      %1411 = vperm.xlu0 %1410, %v1277
      %v1412 = vpop.permute.xlu0 %1411
      %1415 = vset.pattern.permute.xlu0 0
      %1416 = vperm.xlu0 %1415, %v1278
      %v1417 = vpop.permute.xlu0 %1416
      %1420 = vset.pattern.permute.xlu0 0
      %1421 = vperm.xlu0 %1420, %v1279
      %v1422 = vpop.permute.xlu0 %1421
      %1425 = vset.pattern.permute.xlu0 0
      %1426 = vperm.xlu0 %1425, %v1280
      %v1427 = vpop.permute.xlu0 %1426
      %1430 = vset.pattern.permute.xlu0 0
      %1431 = vperm.xlu0 %1430, %v1281
      %v1432 = vpop.permute.xlu0 %1431
      %1435 = vset.pattern.permute.xlu0 0
      %1436 = vperm.xlu0 %1435, %v1282
      %v1437 = vpop.permute.xlu0 %1436
      %1440 = vset.pattern.permute.xlu0 0
      %1441 = vperm.xlu0 %1440, %v1283
      %v1442 = vpop.permute.xlu0 %1441
      %1445 = vset.pattern.permute.xlu0 0
      %1446 = vperm.xlu0 %1445, %v1284
      %v1447 = vpop.permute.xlu0 %1446
      %1450 = vset.pattern.permute.xlu0 0
      %1451 = vperm.xlu0 %1450, %v1285
      %v1452 = vpop.permute.xlu0 %1451
      %1455 = vset.pattern.permute.xlu0 0
      %1456 = vperm.xlu0 %1455, %v1286
      %v1457 = vpop.permute.xlu0 %1456
      %1460 = vset.pattern.permute.xlu0 0
      %1461 = vperm.xlu0 %1460, %v1287
      %v1462 = vpop.permute.xlu0 %1461
      %1465 = vset.pattern.permute.xlu0 0
      %1466 = vperm.xlu0 %1465, %v1288
      %v1467 = vpop.permute.xlu0 %1466
      %1470 = vset.pattern.permute.xlu0 0
      %1471 = vperm.xlu0 %1470, %v1289
      %v1472 = vpop.permute.xlu0 %1471
      %1475 = vset.pattern.permute.xlu0 0
      %1476 = vperm.xlu0 %1475, %v1290
      %v1477 = vpop.permute.xlu0 %1476
      %1480 = vset.pattern.permute.xlu0 0
      %1481 = vperm.xlu0 %1480, %v1291
      %v1482 = vpop.permute.xlu0 %1481
      %1485 = vset.pattern.permute.xlu0 0
      %1486 = vperm.xlu0 %1485, %v1292
      %v1487 = vpop.permute.xlu0 %1486
      %1490 = vset.pattern.permute.xlu0 0
      %1491 = vperm.xlu0 %1490, %v1293
      %v1492 = vpop.permute.xlu0 %1491
      %1495 = vset.pattern.permute.xlu0 0
      %1496 = vperm.xlu0 %1495, %v1294
      %v1497 = vpop.permute.xlu0 %1496
      %1500 = vset.pattern.permute.xlu0 0
      %1501 = vperm.xlu0 %1500, %v1295
      %v1502 = vpop.permute.xlu0 %1501
      %1505 = vset.pattern.permute.xlu0 0
      %1506 = vperm.xlu0 %1505, %v1296
      %v1507 = vpop.permute.xlu0 %1506
      %1510 = vset.pattern.permute.xlu0 0
      %1511 = vperm.xlu0 %1510, %v1297
      %v1512 = vpop.permute.xlu0 %1511
      %1515 = vset.pattern.permute.xlu0 0
      %1516 = vperm.xlu0 %1515, %v1298
      %v1517 = vpop.permute.xlu0 %1516
      %1520 = vset.pattern.permute.xlu0 0
      %1521 = vperm.xlu0 %1520, %v1299
      %v1522 = vpop.permute.xlu0 %1521
      %1525 = vset.pattern.permute.xlu0 0
      %1526 = vperm.xlu0 %1525, %v1300
      %v1527 = vpop.permute.xlu0 %1526
      %1530 = vset.pattern.permute.xlu0 0
      %1531 = vperm.xlu0 %1530, %v1301
      %v1532 = vpop.permute.xlu0 %1531
      %1535 = vset.pattern.permute.xlu0 0
      %1536 = vperm.xlu0 %1535, %v1302
      %v1537 = vpop.permute.xlu0 %1536
      %1540 = vset.pattern.permute.xlu0 0
      %1541 = vperm.xlu0 %1540, %v1303
      %v1542 = vpop.permute.xlu0 %1541
      %1545 = vset.pattern.permute.xlu0 0
      %1546 = vperm.xlu0 %1545, %v1304
      %v1547 = vpop.permute.xlu0 %1546
      %1550 = vset.pattern.permute.xlu0 0
      %1551 = vperm.xlu0 %1550, %v1305
      %v1552 = vpop.permute.xlu0 %1551
      %1555 = vset.pattern.permute.xlu0 0
      %1556 = vperm.xlu0 %1555, %v1306
      %v1557 = vpop.permute.xlu0 %1556
      %1560 = vset.pattern.permute.xlu0 0
      %1561 = vperm.xlu0 %1560, %v1307
      %v1562 = vpop.permute.xlu0 %1561
      %v1564 = vmul.f32 %v509, %v1407
      %v1565 = vmul.f32 %v511, %v1407
      %v1566 = vmul.f32 %v515, %v1412
      %v1567 = vmul.f32 %v517, %v1412
      %v1568 = vmul.f32 %v521, %v1417
      %v1569 = vmul.f32 %v523, %v1417
      %v1570 = vmul.f32 %v527, %v1422
      %v1571 = vmul.f32 %v529, %v1422
      %v1572 = vmul.f32 %v533, %v1427
      %v1573 = vmul.f32 %v535, %v1427
      %v1574 = vmul.f32 %v539, %v1432
      %v1575 = vmul.f32 %v541, %v1432
      %v1576 = vmul.f32 %v545, %v1437
      %v1577 = vmul.f32 %v547, %v1437
      %v1578 = vmul.f32 %v551, %v1442
      %v1579 = vmul.f32 %v553, %v1442
      %v1580 = vmul.f32 %v557, %v1447
      %v1581 = vmul.f32 %v559, %v1447
      %v1582 = vmul.f32 %v563, %v1452
      %v1583 = vmul.f32 %v565, %v1452
      %v1584 = vmul.f32 %v569, %v1457
      %v1585 = vmul.f32 %v571, %v1457
      %v1586 = vmul.f32 %v575, %v1462
      %v1587 = vmul.f32 %v577, %v1462
      %v1588 = vmul.f32 %v581, %v1467
      %v1589 = vmul.f32 %v583, %v1467
      %v1590 = vmul.f32 %v587, %v1472
      %v1591 = vmul.f32 %v589, %v1472
      %v1592 = vmul.f32 %v593, %v1477
      %v1593 = vmul.f32 %v595, %v1477
      %v1594 = vmul.f32 %v599, %v1482
      %v1595 = vmul.f32 %v601, %v1482
      %v1596 = vmul.f32 %v605, %v1487
      %v1597 = vmul.f32 %v607, %v1487
      %v1598 = vmul.f32 %v611, %v1492
      %v1599 = vmul.f32 %v613, %v1492
      %v1600 = vmul.f32 %v617, %v1497
      %v1601 = vmul.f32 %v619, %v1497
      %v1602 = vmul.f32 %v623, %v1502
      %v1603 = vmul.f32 %v625, %v1502
      %v1604 = vmul.f32 %v629, %v1507
      %v1605 = vmul.f32 %v631, %v1507
      %v1606 = vmul.f32 %v635, %v1512
      %v1607 = vmul.f32 %v637, %v1512
      %v1608 = vmul.f32 %v641, %v1517
      %v1609 = vmul.f32 %v643, %v1517
      %v1610 = vmul.f32 %v647, %v1522
      %v1611 = vmul.f32 %v649, %v1522
      %v1612 = vmul.f32 %v653, %v1527
      %v1613 = vmul.f32 %v655, %v1527
      %v1614 = vmul.f32 %v659, %v1532
      %v1615 = vmul.f32 %v661, %v1532
      %v1616 = vmul.f32 %v665, %v1537
      %v1617 = vmul.f32 %v667, %v1537
      %v1618 = vmul.f32 %v671, %v1542
      %v1619 = vmul.f32 %v673, %v1542
      %v1620 = vmul.f32 %v677, %v1547
      %v1621 = vmul.f32 %v679, %v1547
      %v1622 = vmul.f32 %v683, %v1552
      %v1623 = vmul.f32 %v685, %v1552
      %v1624 = vmul.f32 %v689, %v1557
      %v1625 = vmul.f32 %v691, %v1557
      %v1626 = vmul.f32 %v695, %v1562
      %v1627 = vmul.f32 %v697, %v1562
      %1629 = vset.pattern.permute.xlu0 0
      %1630 = vperm.xlu0 %1629, %v1372
      %v1631 = vpop.permute.xlu0 %1630
      %1634 = vset.pattern.permute.xlu0 0
      %1635 = vperm.xlu0 %1634, %v1373
      %v1636 = vpop.permute.xlu0 %1635
      %1639 = vset.pattern.permute.xlu0 0
      %1640 = vperm.xlu0 %1639, %v1374
      %v1641 = vpop.permute.xlu0 %1640
      %1644 = vset.pattern.permute.xlu0 0
      %1645 = vperm.xlu0 %1644, %v1375
      %v1646 = vpop.permute.xlu0 %1645
      %1649 = vset.pattern.permute.xlu0 0
      %1650 = vperm.xlu0 %1649, %v1376
      %v1651 = vpop.permute.xlu0 %1650
      %1654 = vset.pattern.permute.xlu0 0
      %1655 = vperm.xlu0 %1654, %v1377
      %v1656 = vpop.permute.xlu0 %1655
      %1659 = vset.pattern.permute.xlu0 0
      %1660 = vperm.xlu0 %1659, %v1378
      %v1661 = vpop.permute.xlu0 %1660
      %1664 = vset.pattern.permute.xlu0 0
      %1665 = vperm.xlu0 %1664, %v1379
      %v1666 = vpop.permute.xlu0 %1665
      %1669 = vset.pattern.permute.xlu0 0
      %1670 = vperm.xlu0 %1669, %v1380
      %v1671 = vpop.permute.xlu0 %1670
      %1674 = vset.pattern.permute.xlu0 0
      %1675 = vperm.xlu0 %1674, %v1381
      %v1676 = vpop.permute.xlu0 %1675
      %1679 = vset.pattern.permute.xlu0 0
      %1680 = vperm.xlu0 %1679, %v1382
      %v1681 = vpop.permute.xlu0 %1680
      %1684 = vset.pattern.permute.xlu0 0
      %1685 = vperm.xlu0 %1684, %v1383
      %v1686 = vpop.permute.xlu0 %1685
      %1689 = vset.pattern.permute.xlu0 0
      %1690 = vperm.xlu0 %1689, %v1384
      %v1691 = vpop.permute.xlu0 %1690
      %1694 = vset.pattern.permute.xlu0 0
      %1695 = vperm.xlu0 %1694, %v1385
      %v1696 = vpop.permute.xlu0 %1695
      %1699 = vset.pattern.permute.xlu0 0
      %1700 = vperm.xlu0 %1699, %v1386
      %v1701 = vpop.permute.xlu0 %1700
      %1704 = vset.pattern.permute.xlu0 0
      %1705 = vperm.xlu0 %1704, %v1387
      %v1706 = vpop.permute.xlu0 %1705
      %1709 = vset.pattern.permute.xlu0 0
      %1710 = vperm.xlu0 %1709, %v1388
      %v1711 = vpop.permute.xlu0 %1710
      %1714 = vset.pattern.permute.xlu0 0
      %1715 = vperm.xlu0 %1714, %v1389
      %v1716 = vpop.permute.xlu0 %1715
      %1719 = vset.pattern.permute.xlu0 0
      %1720 = vperm.xlu0 %1719, %v1390
      %v1721 = vpop.permute.xlu0 %1720
      %1724 = vset.pattern.permute.xlu0 0
      %1725 = vperm.xlu0 %1724, %v1391
      %v1726 = vpop.permute.xlu0 %1725
      %1729 = vset.pattern.permute.xlu0 0
      %1730 = vperm.xlu0 %1729, %v1392
      %v1731 = vpop.permute.xlu0 %1730
      %1734 = vset.pattern.permute.xlu0 0
      %1735 = vperm.xlu0 %1734, %v1393
      %v1736 = vpop.permute.xlu0 %1735
      %1739 = vset.pattern.permute.xlu0 0
      %1740 = vperm.xlu0 %1739, %v1394
      %v1741 = vpop.permute.xlu0 %1740
      %1744 = vset.pattern.permute.xlu0 0
      %1745 = vperm.xlu0 %1744, %v1395
      %v1746 = vpop.permute.xlu0 %1745
      %1749 = vset.pattern.permute.xlu0 0
      %1750 = vperm.xlu0 %1749, %v1396
      %v1751 = vpop.permute.xlu0 %1750
      %1754 = vset.pattern.permute.xlu0 0
      %1755 = vperm.xlu0 %1754, %v1397
      %v1756 = vpop.permute.xlu0 %1755
      %1759 = vset.pattern.permute.xlu0 0
      %1760 = vperm.xlu0 %1759, %v1398
      %v1761 = vpop.permute.xlu0 %1760
      %1764 = vset.pattern.permute.xlu0 0
      %1765 = vperm.xlu0 %1764, %v1399
      %v1766 = vpop.permute.xlu0 %1765
      %1769 = vset.pattern.permute.xlu0 0
      %1770 = vperm.xlu0 %1769, %v1400
      %v1771 = vpop.permute.xlu0 %1770
      %1774 = vset.pattern.permute.xlu0 0
      %1775 = vperm.xlu0 %1774, %v1401
      %v1776 = vpop.permute.xlu0 %1775
      %1779 = vset.pattern.permute.xlu0 0
      %1780 = vperm.xlu0 %1779, %v1402
      %v1781 = vpop.permute.xlu0 %1780
      %1784 = vset.pattern.permute.xlu0 0
      %1785 = vperm.xlu0 %1784, %v1403
      %v1786 = vpop.permute.xlu0 %1785
      %v1788 = vadd.f32 %v1564, %v1631
      %v1789 = vadd.f32 %v1565, %v1631
      %v1790 = vadd.f32 %v1566, %v1636
      %v1791 = vadd.f32 %v1567, %v1636
      %v1792 = vadd.f32 %v1568, %v1641
      %v1793 = vadd.f32 %v1569, %v1641
      %v1794 = vadd.f32 %v1570, %v1646
      %v1795 = vadd.f32 %v1571, %v1646
      %v1796 = vadd.f32 %v1572, %v1651
      %v1797 = vadd.f32 %v1573, %v1651
      %v1798 = vadd.f32 %v1574, %v1656
      %v1799 = vadd.f32 %v1575, %v1656
      %v1800 = vadd.f32 %v1576, %v1661
      %v1801 = vadd.f32 %v1577, %v1661
      %v1802 = vadd.f32 %v1578, %v1666
      %v1803 = vadd.f32 %v1579, %v1666
      %v1804 = vadd.f32 %v1580, %v1671
      %v1805 = vadd.f32 %v1581, %v1671
      %v1806 = vadd.f32 %v1582, %v1676
      %v1807 = vadd.f32 %v1583, %v1676
      %v1808 = vadd.f32 %v1584, %v1681
      %v1809 = vadd.f32 %v1585, %v1681
      %v1810 = vadd.f32 %v1586, %v1686
      %v1811 = vadd.f32 %v1587, %v1686
      %v1812 = vadd.f32 %v1588, %v1691
      %v1813 = vadd.f32 %v1589, %v1691
      %v1814 = vadd.f32 %v1590, %v1696
      %v1815 = vadd.f32 %v1591, %v1696
      %v1816 = vadd.f32 %v1592, %v1701
      %v1817 = vadd.f32 %v1593, %v1701
      %v1818 = vadd.f32 %v1594, %v1706
      %v1819 = vadd.f32 %v1595, %v1706
      %v1820 = vadd.f32 %v1596, %v1711
      %v1821 = vadd.f32 %v1597, %v1711
      %v1822 = vadd.f32 %v1598, %v1716
      %v1823 = vadd.f32 %v1599, %v1716
      %v1824 = vadd.f32 %v1600, %v1721
      %v1825 = vadd.f32 %v1601, %v1721
      %v1826 = vadd.f32 %v1602, %v1726
      %v1827 = vadd.f32 %v1603, %v1726
      %v1828 = vadd.f32 %v1604, %v1731
      %v1829 = vadd.f32 %v1605, %v1731
      %v1830 = vadd.f32 %v1606, %v1736
      %v1831 = vadd.f32 %v1607, %v1736
      %v1832 = vadd.f32 %v1608, %v1741
      %v1833 = vadd.f32 %v1609, %v1741
      %v1834 = vadd.f32 %v1610, %v1746
      %v1835 = vadd.f32 %v1611, %v1746
      %v1836 = vadd.f32 %v1612, %v1751
      %v1837 = vadd.f32 %v1613, %v1751
      %v1838 = vadd.f32 %v1614, %v1756
      %v1839 = vadd.f32 %v1615, %v1756
      %v1840 = vadd.f32 %v1616, %v1761
      %v1841 = vadd.f32 %v1617, %v1761
      %v1842 = vadd.f32 %v1618, %v1766
      %v1843 = vadd.f32 %v1619, %v1766
      %v1844 = vadd.f32 %v1620, %v1771
      %v1845 = vadd.f32 %v1621, %v1771
      %v1846 = vadd.f32 %v1622, %v1776
      %v1847 = vadd.f32 %v1623, %v1776
      %v1848 = vadd.f32 %v1624, %v1781
      %v1849 = vadd.f32 %v1625, %v1781
      %v1850 = vadd.f32 %v1626, %v1786
      %v1851 = vadd.f32 %v1627, %v1786
      %1852 = vst [vmem:[%s248] sm:$0xff] %v1788
      %1853 = vst.msk [vmem:[%s248 + $0x8] sm:$0xff] %vm699, %v1789
      %1854 = vst [vmem:[%s248 + $0x10] sm:$0xff] %v1790
      %1855 = vst.msk [vmem:[%s248 + $0x18] sm:$0xff] %vm699, %v1791
      %1856 = vst [vmem:[%s248 + $0x20] sm:$0xff] %v1792
      %1857 = vst.msk [vmem:[%s248 + $0x28] sm:$0xff] %vm699, %v1793
      %1858 = vst [vmem:[%s248 + $0x30] sm:$0xff] %v1794
      %1859 = vst.msk [vmem:[%s248 + $0x38] sm:$0xff] %vm699, %v1795
      %1860 = vst [vmem:[%s248 + $0x40] sm:$0xff] %v1796
      %1861 = vst.msk [vmem:[%s248 + $0x48] sm:$0xff] %vm699, %v1797
      %1862 = vst [vmem:[%s248 + $0x50] sm:$0xff] %v1798
      %1863 = vst.msk [vmem:[%s248 + $0x58] sm:$0xff] %vm699, %v1799
      %1864 = vst [vmem:[%s248 + $0x60] sm:$0xff] %v1800
      %1865 = vst.msk [vmem:[%s248 + $0x68] sm:$0xff] %vm699, %v1801
      %1866 = vst [vmem:[%s248 + $0x70] sm:$0xff] %v1802
      %1867 = vst.msk [vmem:[%s248 + $0x78] sm:$0xff] %vm699, %v1803
      %1868 = vst [vmem:[%s248 + $0x80] sm:$0xff] %v1804
      %1869 = vst.msk [vmem:[%s248 + $0x88] sm:$0xff] %vm699, %v1805
      %1870 = vst [vmem:[%s248 + $0x90] sm:$0xff] %v1806
      %1871 = vst.msk [vmem:[%s248 + $0x98] sm:$0xff] %vm699, %v1807
      %1872 = vst [vmem:[%s248 + $0xa0] sm:$0xff] %v1808
      %1873 = vst.msk [vmem:[%s248 + $0xa8] sm:$0xff] %vm699, %v1809
      %1874 = vst [vmem:[%s248 + $0xb0] sm:$0xff] %v1810
      %1875 = vst.msk [vmem:[%s248 + $0xb8] sm:$0xff] %vm699, %v1811
      %1876 = vst [vmem:[%s248 + $0xc0] sm:$0xff] %v1812
      %1877 = vst.msk [vmem:[%s248 + $0xc8] sm:$0xff] %vm699, %v1813
      %1878 = vst [vmem:[%s248 + $0xd0] sm:$0xff] %v1814
      %1879 = vst.msk [vmem:[%s248 + $0xd8] sm:$0xff] %vm699, %v1815
      %1880 = vst [vmem:[%s248 + $0xe0] sm:$0xff] %v1816
      %1881 = vst.msk [vmem:[%s248 + $0xe8] sm:$0xff] %vm699, %v1817
      %1882 = vst [vmem:[%s248 + $0xf0] sm:$0xff] %v1818
      %1883 = vst.msk [vmem:[%s248 + $0xf8] sm:$0xff] %vm699, %v1819
      %1884 = vst [vmem:[%s248 + $0x100] sm:$0xff] %v1820
      %1885 = vst.msk [vmem:[%s248 + $0x108] sm:$0xff] %vm699, %v1821
      %1886 = vst [vmem:[%s248 + $0x110] sm:$0xff] %v1822
      %1887 = vst.msk [vmem:[%s248 + $0x118] sm:$0xff] %vm699, %v1823
      %1888 = vst [vmem:[%s248 + $0x120] sm:$0xff] %v1824
      %1889 = vst.msk [vmem:[%s248 + $0x128] sm:$0xff] %vm699, %v1825
      %1890 = vst [vmem:[%s248 + $0x130] sm:$0xff] %v1826
      %1891 = vst.msk [vmem:[%s248 + $0x138] sm:$0xff] %vm699, %v1827
      %1892 = vst [vmem:[%s248 + $0x140] sm:$0xff] %v1828
      %1893 = vst.msk [vmem:[%s248 + $0x148] sm:$0xff] %vm699, %v1829
      %1894 = vst [vmem:[%s248 + $0x150] sm:$0xff] %v1830
      %1895 = vst.msk [vmem:[%s248 + $0x158] sm:$0xff] %vm699, %v1831
      %1896 = vst [vmem:[%s248 + $0x160] sm:$0xff] %v1832
      %1897 = vst.msk [vmem:[%s248 + $0x168] sm:$0xff] %vm699, %v1833
      %1898 = vst [vmem:[%s248 + $0x170] sm:$0xff] %v1834
      %1899 = vst.msk [vmem:[%s248 + $0x178] sm:$0xff] %vm699, %v1835
      %1900 = vst [vmem:[%s248 + $0x180] sm:$0xff] %v1836
      %1901 = vst.msk [vmem:[%s248 + $0x188] sm:$0xff] %vm699, %v1837
      %1902 = vst [vmem:[%s248 + $0x190] sm:$0xff] %v1838
      %1903 = vst.msk [vmem:[%s248 + $0x198] sm:$0xff] %vm699, %v1839
      %1904 = vst [vmem:[%s248 + $0x1a0] sm:$0xff] %v1840
      %1905 = vst.msk [vmem:[%s248 + $0x1a8] sm:$0xff] %vm699, %v1841
      %1906 = vst [vmem:[%s248 + $0x1b0] sm:$0xff] %v1842
      %1907 = vst.msk [vmem:[%s248 + $0x1b8] sm:$0xff] %vm699, %v1843
      %1908 = vst [vmem:[%s248 + $0x1c0] sm:$0xff] %v1844
      %1909 = vst.msk [vmem:[%s248 + $0x1c8] sm:$0xff] %vm699, %v1845
      %1910 = vst [vmem:[%s248 + $0x1d0] sm:$0xff] %v1846
      %1911 = vst.msk [vmem:[%s248 + $0x1d8] sm:$0xff] %vm699, %v1847
      %1912 = vst [vmem:[%s248 + $0x1e0] sm:$0xff] %v1848
      %1913 = vst.msk [vmem:[%s248 + $0x1e8] sm:$0xff] %vm699, %v1849
      %1914 = vst [vmem:[%s248 + $0x1f0] sm:$0xff] %v1850
      %1915 = vst.msk [vmem:[%s248 + $0x1f8] sm:$0xff] %vm699, %v1851
      %s1916 = smul.u32 32, %s15
      %p1917 = scmp.lt.s32.totalorder %s1916, 127
      %s1918 = scalar_select %p1917, %s1916, 127
      %s1919 = smul.addr %s1918, 2
      %s1920 = smul.addr %s1919, 8
      %s1921 = scalar_lea.vmem %s4, %s1920
      // Predicated region
      $region37: #{tpu_custom_call.1} parent=35 // pred_check
        %p1922 = pneg %p132
      $region38: #{tpu_custom_call.1} parent=35 // pred_check_branch
        %1924 = sbr.rel (%p1922) target = $region40
      $region39: #{tpu_custom_call.1} parent=35 // pred_region
        %s1925 = smul.u32 32, %s15
      $region40: #{tpu_custom_call.1} parent=35 // pred_fallthru
        _
    $region36: #{tpu_custom_call.1} parent=5 // pred_fallthru
      _
    %p1926 = scmp.le.s32.totalorder 2, %s10
    // Predicated region
    $region41: #{tpu_custom_call.1} parent=5 // pred_check
      %p1927 = pneg %p1926
    $region42: #{tpu_custom_call.1} parent=5 // pred_check_branch
      %1929 = sbr.rel (%p1927) target = $region44
    $region43: #{tpu_custom_call.1} parent=5 // pred_region
      %s1930 = ssub.s32 %s10, 2
      // Predicated region
      $region45: #{tpu_custom_call.1} parent=43 // pred_check
        %p1931 = pneg %p138
      $region46: #{tpu_custom_call.1} parent=43 // pred_check_branch
        %1933 = sbr.rel (%p1931) target = $region48
      $region47: #{tpu_custom_call.1} parent=43 // pred_region
        %s1934 = smul.u32 32, %s16
        %p1935 = scmp.lt.s32.totalorder %s1934, 127
        %s1936 = scalar_select %p1935, %s1934, 127
        %s1937 = smul.addr %s1936, 2
        %s1938 = smul.addr %s1937, 8
        %s1939 = scalar_lea.vmem %s4, %s1938
      $region48: #{tpu_custom_call.1} parent=43 // pred_fallthru
        _
    $region44: #{tpu_custom_call.1} parent=5 // pred_fallthru
      _
  $region6: #{tpu_custom_call.1} parent=0 // loop_footer
    %s14 = sadd.s32 1, %s10
  $region7: #{tpu_custom_call.1} parent=0 // loop_footer_branch
    %9 = sbr.rel target = $region3
  $region8: #{tpu_custom_call.1} parent=0 // loop_exit
    _

</llo_original>
